<compile_context>
chip_gen: v5e
topology: v5e:2x2
jax: 0.10.0
libtpu: 0.0.40
codegen_flags: <defaults>
</compile_context>

<pallas_src>
import jax
import jax.numpy as jnp
from jax.experimental import pallas as pl
from jax.experimental.pallas import tpu as pltpu


# ----------------------------------------------------------------------------
# Small helpers
# ----------------------------------------------------------------------------
def _round_up(x, m):
    return ((x + m - 1) // m) * m


def _pick_tile_m(M, max_tile=512):
    """Multiple-of-8 M-tile (<= max_tile) minimizing zero padding of M.

    Prefers the largest tile among those with minimal padding, so small M
    stays a single block and large M avoids padded rows entirely when a
    divisor exists (e.g. 1568 -> 392x4 with zero padding).
    """
    limit = min(max_tile, _round_up(M, 8))
    best_tm, best_pad = 8, None
    for tm in range(8, limit + 1, 8):
        pad = _round_up(M, tm) - M
        if best_pad is None or pad <= best_pad:
            best_pad, best_tm = pad, tm
    return best_tm


def _default_compute_dtype():
    """bf16 MXU inputs on v6e/v7x, f32 elsewhere (v5e has no bf16 VPU)."""
    try:
        kind = jax.devices()[0].device_kind.lower()
    except Exception:
        return jnp.float32
    if ("v6" in kind) or ("v7" in kind):
        return jnp.bfloat16
    return jnp.float32


# ----------------------------------------------------------------------------
# Pallas kernels
# ----------------------------------------------------------------------------
def _matmul_bias_relu_kernel(x_ref, w_ref, b_ref, o_ref):
    """o = relu(x @ w + b).  K and N are pre-padded to multiples of 128."""
    acc = jnp.dot(x_ref[...], w_ref[...], preferred_element_type=jnp.float32)
    acc = jnp.maximum(acc + b_ref[...], 0.0)          # b is (1, N), broadcasts
    o_ref[...] = acc.astype(o_ref.dtype)


def _fc_chain_kernel(x_ref, w1_ref, b1_ref, w2_ref, b2_ref, w3_ref, b3_ref,
                     o_ref):
    """Fused fc1 -> ReLU -> fc2 -> ReLU -> fc3.  All weights resident in VMEM.

    Padded weight rows/cols are zero, so the extra lanes stay exactly zero
    through the chain (relu(0 + 0) == 0) and never pollute valid outputs.
    """
    cd = w1_ref.dtype
    h = jnp.dot(x_ref[...], w1_ref[...], preferred_element_type=jnp.float32)
    h = jnp.maximum(h + b1_ref[...], 0.0).astype(cd)
    h = jnp.dot(h, w2_ref[...], preferred_element_type=jnp.float32)
    h = jnp.maximum(h + b2_ref[...], 0.0).astype(cd)
    h = jnp.dot(h, w3_ref[...], preferred_element_type=jnp.float32)
    o_ref[...] = (h + b3_ref[...]).astype(o_ref.dtype)


# ----------------------------------------------------------------------------
# pallas_call wrappers
# ----------------------------------------------------------------------------
def matmul_bias_relu_pallas(x, w, b, *, max_tile_m=512):
    """x: [M, K], w: [K, N], b: [1, N]  ->  relu(x @ w + b) : [M, N].

    K and N must already be multiples of 128 (zero-padded).  The M axis is
    tiled with a padding-minimizing multiple-of-8 tile and marked "parallel"
    (pipelining + megacore sharding).
    """
    M, K = x.shape
    Kw, N = w.shape
    assert K == Kw and K % 128 == 0 and N % 128 == 0

    tm = _pick_tile_m(M, max_tile_m)
    M_pad = _round_up(M, tm)
    if M_pad != M:
        x = jnp.pad(x, ((0, M_pad - M), (0, 0)))

    out = pl.pallas_call(
        _matmul_bias_relu_kernel,
        out_shape=jax.ShapeDtypeStruct((M_pad, N), x.dtype),
        grid=(M_pad // tm,),
        in_specs=[
            pl.BlockSpec((tm, K), lambda i: (i, 0)),
            pl.BlockSpec((K, N), lambda i: (0, 0)),
            pl.BlockSpec((1, N), lambda i: (0, 0)),
        ],
        out_specs=pl.BlockSpec((tm, N), lambda i: (i, 0)),
        compiler_params=pltpu.CompilerParams(
            dimension_semantics=("parallel",)),
    )(x, w, b)
    return out[:M] if M_pad != M else out


def fc_chain_pallas(x, w1, b1, w2, b2, w3, b3, *, max_tile_m=512):
    """Fused 3-layer MLP.  x: [M, K] (K padded), all weights padded to 128s."""
    M, K = x.shape
    N1, N2, N3 = w1.shape[1], w2.shape[1], w3.shape[1]
    assert K % 128 == 0 and N1 % 128 == 0 and N2 % 128 == 0 and N3 % 128 == 0

    tm = _pick_tile_m(M, max_tile_m)
    M_pad = _round_up(M, tm)
    if M_pad != M:
        x = jnp.pad(x, ((0, M_pad - M), (0, 0)))

    out = pl.pallas_call(
        _fc_chain_kernel,
        out_shape=jax.ShapeDtypeStruct((M_pad, N3), jnp.float32),
        grid=(M_pad // tm,),
        in_specs=[
            pl.BlockSpec((tm, K), lambda i: (i, 0)),
            pl.BlockSpec((K, N1), lambda i: (0, 0)),
            pl.BlockSpec((1, N1), lambda i: (0, 0)),
            pl.BlockSpec((N1, N2), lambda i: (0, 0)),
            pl.BlockSpec((1, N2), lambda i: (0, 0)),
            pl.BlockSpec((N2, N3), lambda i: (0, 0)),
            pl.BlockSpec((1, N3), lambda i: (0, 0)),
        ],
        out_specs=pl.BlockSpec((tm, N3), lambda i: (i, 0)),
        compiler_params=pltpu.CompilerParams(
            dimension_semantics=("parallel",)),
    )(x, w1, b1, w2, b2, w3, b3)
    return out[:M] if M_pad != M else out


# ----------------------------------------------------------------------------
# Plain-JAX glue: im2col (channels-last) and 2x2 max-pool
# TODO(synk): im2col / max-pool stay as XLA glue — a standalone lane-sparse
# Pallas pool kernel only adds launches + HBM round trips at these sizes.
# ----------------------------------------------------------------------------
def _im2col_nhwc(x, k):
    """x: [B, H, W, C] -> patches [B*OH*OW, k*k*C], feature order (kh, kw, c)."""
    B, H, W, C = x.shape
    OH, OW = H - k + 1, W - k + 1
    cols = []
    for kh in range(k):
        for kw in range(k):
            cols.append(x[:, kh:kh + OH, kw:kw + OW, :])   # [B, OH, OW, C]
    p = jnp.stack(cols, axis=3)                            # [B, OH, OW, k*k, C]
    return p.reshape(B * OH * OW, k * k * C), OH, OW


def _maxpool2x2_nhwc(x):
    """2x2 max pool, stride 2, NHWC (H, W even).  Cheap XLA reshape + max."""
    B, H, W, C = x.shape
    return x.reshape(B, H // 2, 2, W // 2, 2, C).max(axis=(2, 4))


def _conv2d_relu(x, w_mat, b_row, *, out_channels, ksize):
    """VALID conv (PyTorch Conv2d) + ReLU via im2col + Pallas GEMM.  NHWC."""
    B = x.shape[0]
    patches, OH, OW = _im2col_nhwc(x, ksize)               # [B*OH*OW, k*k*C]
    K_pad = w_mat.shape[0]
    patches = jnp.pad(patches, ((0, 0), (0, K_pad - patches.shape[1])))
    out = matmul_bias_relu_pallas(patches, w_mat, b_row)   # [B*OH*OW, 128]
    return out[:, :out_channels].reshape(B, OH, OW, out_channels)


# ----------------------------------------------------------------------------
# Parameters: PyTorch-layout init + one-time conversion to GEMM-ready layout
# ----------------------------------------------------------------------------
def init_lenet5_rgb_params(key):
    ks = jax.random.split(key, 10)

    def _w(k, shape, fan_in):
        return jax.random.normal(k, shape, jnp.float32) / jnp.sqrt(fan_in)

    return {
        "conv1_w": _w(ks[0], (6, 3, 5, 5), 3 * 5 * 5),
        "conv1_b": _w(ks[1], (6,), 3 * 5 * 5),
        "conv2_w": _w(ks[2], (16, 6, 5, 5), 6 * 5 * 5),
        "conv2_b": _w(ks[3], (16,), 6 * 5 * 5),
        "fc1_w":   _w(ks[4], (400, 120), 400),   # [in, out], in-dim in (c,h,w) order
        "fc1_b":   _w(ks[5], (120,), 400),
        "fc2_w":   _w(ks[6], (120, 84), 120),
        "fc2_b":   _w(ks[7], (84,), 120),
        "fc3_w":   _w(ks[8], (84, 10), 84),
        "fc3_b":   _w(ks[9], (10,), 84),
    }


def prepare_params(params, compute_dtype=jnp.float32):
    """Precompute GEMM-ready weights once (padded, transposed, reordered)."""
    cd = compute_dtype

    def pad2(a, rows, cols):
        r, c = a.shape
        return jnp.pad(a, ((0, rows - r), (0, cols - c)))

    def prep_conv(w, b, k_pad, n_pad):
        OutC, InC, KH, KW = w.shape
        # rows ordered (kh, kw, c) to match channels-last im2col patches
        wm = w.transpose(2, 3, 1, 0).reshape(KH * KW * InC, OutC)
        wm = pad2(wm, k_pad, n_pad).astype(cd)
        bp = jnp.pad(b, (0, n_pad - b.shape[0])).reshape(1, n_pad)
        return wm, bp.astype(jnp.float32)

    def prep_fc(w, b, k_pad, n_pad):
        wm = pad2(w, k_pad, n_pad).astype(cd)
        bp = jnp.pad(b, (0, n_pad - b.shape[0])).reshape(1, n_pad)
        return wm, bp.astype(jnp.float32)

    # fc1 rows reordered from torch's NCHW flatten (c, h, w) to our NHWC
    # flatten (h, w, c) so semantics match x.view(-1, 16*5*5) exactly.
    fc1_w = (params["fc1_w"].reshape(16, 5, 5, 120)
             .transpose(1, 2, 0, 3).reshape(400, 120))

    p = {}
    p["conv1_w"], p["conv1_b"] = prep_conv(params["conv1_w"], params["conv1_b"], 128, 128)
    p["conv2_w"], p["conv2_b"] = prep_conv(params["conv2_w"], params["conv2_b"], 256, 128)
    p["fc1_w"], p["fc1_b"] = prep_fc(fc1_w, params["fc1_b"], 512, 128)
    p["fc2_w"], p["fc2_b"] = prep_fc(params["fc2_w"], params["fc2_b"], 128, 128)
    p["fc3_w"], p["fc3_b"] = prep_fc(params["fc3_w"], params["fc3_b"], 128, 128)
    return p


# ----------------------------------------------------------------------------
# Forward (Pallas) and a pure-JAX reference for validation
# ----------------------------------------------------------------------------
@jax.jit
def lenet5_rgb_forward(p, x):
    """p: prepared (GEMM-ready) params; x: [B, 3, 32, 32] NCHW (PyTorch)."""
    cd = p["conv1_w"].dtype
    B = x.shape[0]

    x = x.transpose(0, 2, 3, 1).astype(cd)                       # NHWC [B,32,32,3]
    x = _conv2d_relu(x, p["conv1_w"], p["conv1_b"], out_channels=6, ksize=5)   # [B,28,28,6]
    x = _maxpool2x2_nhwc(x)                                      # [B,14,14,6]
    x = _conv2d_relu(x, p["conv2_w"], p["conv2_b"], out_channels=16, ksize=5)  # [B,10,10,16]
    x = _maxpool2x2_nhwc(x)                                      # [B,5,5,16]

    x = x.reshape(B, 5 * 5 * 16).astype(cd)                      # (h,w,c) flatten
    x = jnp.pad(x, ((0, 0), (0, p["fc1_w"].shape[0] - x.shape[1])))  # pad K 400->512
    out = fc_chain_pallas(x, p["fc1_w"], p["fc1_b"],
                          p["fc2_w"], p["fc2_b"],
                          p["fc3_w"], p["fc3_b"])                # [B, 128]
    return out[:, :10]


@jax.jit
def lenet5_rgb_reference(params, x):
    """Plain-XLA f32 reference matching the PyTorch module (NCHW, torch layout)."""
    def conv_relu(x, w, b):
        y = jax.lax.conv_general_dilated(
            x, w, window_strides=(1, 1), padding="VALID",
            dimension_numbers=("NCHW", "OIHW", "NCHW"))
        return jax.nn.relu(y + b.reshape(1, -1, 1, 1))

    def pool(x):
        B, C, H, W = x.shape
        return x.reshape(B, C, H // 2, 2, W // 2, 2).max(axis=(3, 5))

    x = pool(conv_relu(x, params["conv1_w"], params["conv1_b"]))
    x = pool(conv_relu(x, params["conv2_w"], params["conv2_b"]))
    x = x.reshape(x.shape[0], -1)                        # (c, h, w) flatten = torch
    x = jax.nn.relu(x @ params["fc1_w"] + params["fc1_b"])
    x = jax.nn.relu(x @ params["fc2_w"] + params["fc2_b"])
    return x @ params["fc3_w"] + params["fc3_b"]


if __name__ == "__main__":
    key = jax.random.PRNGKey(0)
    k_params, k_input = jax.random.split(key)

    torch_layout_params = init_lenet5_rgb_params(k_params)

    # LeNet5 architecture requires 32x32 spatial input (16*5*5 flatten dim).
    x = jax.random.normal(k_input, (2, 3, 32, 32), jnp.float32)

    # 1) Numerical check of the Pallas path (f32) against a plain-XLA reference.
    prepped_f32 = prepare_params(torch_layout_params, compute_dtype=jnp.float32)
    out_pallas = jax.block_until_ready(lenet5_rgb_forward(prepped_f32, x))
    out_ref = jax.block_until_ready(lenet5_rgb_reference(torch_layout_params, x))
    assert out_pallas.shape == (2, 10), out_pallas.shape
    assert bool(jnp.all(jnp.isfinite(out_pallas)))
    max_err = float(jnp.max(jnp.abs(out_pallas - out_ref)))
    assert max_err < 2e-2, f"Pallas vs reference mismatch: {max_err}"

    # 2) Run the production path (bf16 on v6e/v7x, f32 elsewhere).
    cd = _default_compute_dtype()
    if cd != jnp.float32:
        prepped = prepare_params(torch_layout_params, compute_dtype=cd)
        out = jax.block_until_ready(lenet5_rgb_forward(prepped, x))
        assert out.shape == (2, 10), out.shape
        assert bool(jnp.all(jnp.isfinite(out)))

    print("KERNEL_OK")
</pallas_src>

<mosaic_0001>
module attributes {stable_mosaic.version = 11 : i64} {
  func.func @_matmul_bias_relu_kernel(%arg0: i32, %arg1: memref<392x128xf32, #tpu.memory_space<vmem>>, %arg2: memref<128x128xf32, #tpu.memory_space<vmem>>, %arg3: memref<1x128xf32, #tpu.memory_space<vmem>>, %arg4: memref<392x128xf32, #tpu.memory_space<vmem>>) attributes {dimension_semantics = [#tpu.dimension_semantics<parallel>], iteration_bounds = array<i64: 4>, scalar_prefetch = 0 : i64, scratch_operands = 0 : i64, tpu.core_type = #tpu.core_type<tc>, window_params = [{transform_indices = @transform_0, window_bounds = array<i64: 392, 128>}, {pipeline_mode = #tpu.pipeline_mode<synchronous>, transform_indices = @transform_1, window_bounds = array<i64: 128, 128>}, {pipeline_mode = #tpu.pipeline_mode<synchronous>, transform_indices = @transform_2, window_bounds = array<i64: 1, 128>}, {transform_indices = @transform_3, window_bounds = array<i64: 392, 128>}]} {
    %c0 = arith.constant 0 : index
    %c0_0 = arith.constant 0 : index
    %0 = vector.load %arg1[%c0, %c0_0] : memref<392x128xf32, #tpu.memory_space<vmem>>, vector<392x128xf32>
    %c0_1 = arith.constant 0 : index
    %c0_2 = arith.constant 0 : index
    %1 = vector.load %arg2[%c0_1, %c0_2] : memref<128x128xf32, #tpu.memory_space<vmem>>, vector<128x128xf32>
    %cst = arith.constant dense<0.000000e+00> : vector<392x128xf32>
    %2 = tpu.matmul %0, %1, %cst {dimension_numbers = #tpu.dot_dimension_numbers<[1], [0], [0], [1], [0, 0, 1, 1], [], []>} : vector<392x128xf32>, vector<128x128xf32>, vector<392x128xf32> -> vector<392x128xf32>
    %c0_3 = arith.constant 0 : index
    %c0_4 = arith.constant 0 : index
    %3 = vector.load %arg3[%c0_3, %c0_4] : memref<1x128xf32, #tpu.memory_space<vmem>>, vector<1x128xf32>
    %4 = vector.broadcast %3 : vector<1x128xf32> to vector<392x128xf32>
    %5 = arith.addf %2, %4 : vector<392x128xf32>
    %cst_5 = arith.constant 0.000000e+00 : f32
    %6 = vector.broadcast %cst_5 : f32 to vector<392x128xf32>
    %7 = arith.maximumf %5, %6 : vector<392x128xf32>
    %c0_6 = arith.constant 0 : index
    %c0_7 = arith.constant 0 : index
    %8 = vector.load %arg4[%c0_6, %c0_7] : memref<392x128xf32, #tpu.memory_space<vmem>>, vector<392x128xf32>
    tpu.vector_store %arg4[%c0_6, %c0_7], %7 {strides = array<i32>} : memref<392x128xf32, #tpu.memory_space<vmem>>, vector<392x128xf32>,
    return
  }
  func.func @transform_0(%arg0: i32) -> (i32, i32) {
    %c0_i32 = arith.constant 0 : i32
    %c0_i32_0 = arith.constant 0 : i32
    return %arg0, %c0_i32 : i32, i32
  }
  func.func @transform_1(%arg0: i32) -> (i32, i32) {
    %c0_i32 = arith.constant 0 : i32
    %c0_i32_0 = arith.constant 0 : i32
    %c0_i32_1 = arith.constant 0 : i32
    return %c0_i32, %c0_i32_0 : i32, i32
  }
  func.func @transform_2(%arg0: i32) -> (i32, i32) {
    %c0_i32 = arith.constant 0 : i32
    %c0_i32_0 = arith.constant 0 : i32
    %c0_i32_1 = arith.constant 0 : i32
    return %c0_i32, %c0_i32_0 : i32, i32
  }
  func.func @transform_3(%arg0: i32) -> (i32, i32) {
    %c0_i32 = arith.constant 0 : i32
    %c0_i32_0 = arith.constant 0 : i32
    return %arg0, %c0_i32 : i32, i32
  }
}

module attributes {stable_mosaic.version = 11 : i64} {
  func.func @_matmul_bias_relu_kernel(%arg0: i32, %arg1: memref<200x256xf32, #tpu.memory_space<vmem>>, %arg2: memref<256x128xf32, #tpu.memory_space<vmem>>, %arg3: memref<1x128xf32, #tpu.memory_space<vmem>>, %arg4: memref<200x128xf32, #tpu.memory_space<vmem>>) attributes {dimension_semantics = [#tpu.dimension_semantics<parallel>], iteration_bounds = array<i64: 1>, scalar_prefetch = 0 : i64, scratch_operands = 0 : i64, tpu.core_type = #tpu.core_type<tc>, window_params = [{transform_indices = @transform_0, window_bounds = array<i64: 200, 256>}, {pipeline_mode = #tpu.pipeline_mode<synchronous>, transform_indices = @transform_1, window_bounds = array<i64: 256, 128>}, {pipeline_mode = #tpu.pipeline_mode<synchronous>, transform_indices = @transform_2, window_bounds = array<i64: 1, 128>}, {transform_indices = @transform_3, window_bounds = array<i64: 200, 128>}]} {
    %c0 = arith.constant 0 : index
    %c0_0 = arith.constant 0 : index
    %0 = vector.load %arg1[%c0, %c0_0] : memref<200x256xf32, #tpu.memory_space<vmem>>, vector<200x256xf32>
    %c0_1 = arith.constant 0 : index
    %c0_2 = arith.constant 0 : index
    %1 = vector.load %arg2[%c0_1, %c0_2] : memref<256x128xf32, #tpu.memory_space<vmem>>, vector<256x128xf32>
    %cst = arith.constant dense<0.000000e+00> : vector<200x128xf32>
    %2 = tpu.matmul %0, %1, %cst {dimension_numbers = #tpu.dot_dimension_numbers<[1], [0], [0], [1], [0, 0, 1, 1], [], []>} : vector<200x256xf32>, vector<256x128xf32>, vector<200x128xf32> -> vector<200x128xf32>
    %c0_3 = arith.constant 0 : index
    %c0_4 = arith.constant 0 : index
    %3 = vector.load %arg3[%c0_3, %c0_4] : memref<1x128xf32, #tpu.memory_space<vmem>>, vector<1x128xf32>
    %4 = vector.broadcast %3 : vector<1x128xf32> to vector<200x128xf32>
    %5 = arith.addf %2, %4 : vector<200x128xf32>
    %cst_5 = arith.constant 0.000000e+00 : f32
    %6 = vector.broadcast %cst_5 : f32 to vector<200x128xf32>
    %7 = arith.maximumf %5, %6 : vector<200x128xf32>
    %c0_6 = arith.constant 0 : index
    %c0_7 = arith.constant 0 : index
    %8 = vector.load %arg4[%c0_6, %c0_7] : memref<200x128xf32, #tpu.memory_space<vmem>>, vector<200x128xf32>
    tpu.vector_store %arg4[%c0_6, %c0_7], %7 {strides = array<i32>} : memref<200x128xf32, #tpu.memory_space<vmem>>, vector<200x128xf32>,
    return
  }
  func.func @transform_0(%arg0: i32) -> (i32, i32) {
    %c0_i32 = arith.constant 0 : i32
    %c0_i32_0 = arith.constant 0 : i32
    return %arg0, %c0_i32 : i32, i32
  }
  func.func @transform_1(%arg0: i32) -> (i32, i32) {
    %c0_i32 = arith.constant 0 : i32
    %c0_i32_0 = arith.constant 0 : i32
    %c0_i32_1 = arith.constant 0 : i32
    return %c0_i32, %c0_i32_0 : i32, i32
  }
  func.func @transform_2(%arg0: i32) -> (i32, i32) {
    %c0_i32 = arith.constant 0 : i32
    %c0_i32_0 = arith.constant 0 : i32
    %c0_i32_1 = arith.constant 0 : i32
    return %c0_i32, %c0_i32_0 : i32, i32
  }
  func.func @transform_3(%arg0: i32) -> (i32, i32) {
    %c0_i32 = arith.constant 0 : i32
    %c0_i32_0 = arith.constant 0 : i32
    return %arg0, %c0_i32 : i32, i32
  }
}

module attributes {stable_mosaic.version = 11 : i64} {
  func.func @_fc_chain_kernel(%arg0: i32, %arg1: memref<8x512xf32, #tpu.memory_space<vmem>>, %arg2: memref<512x128xf32, #tpu.memory_space<vmem>>, %arg3: memref<1x128xf32, #tpu.memory_space<vmem>>, %arg4: memref<128x128xf32, #tpu.memory_space<vmem>>, %arg5: memref<1x128xf32, #tpu.memory_space<vmem>>, %arg6: memref<128x128xf32, #tpu.memory_space<vmem>>, %arg7: memref<1x128xf32, #tpu.memory_space<vmem>>, %arg8: memref<8x128xf32, #tpu.memory_space<vmem>>) attributes {dimension_semantics = [#tpu.dimension_semantics<parallel>], iteration_bounds = array<i64: 1>, scalar_prefetch = 0 : i64, scratch_operands = 0 : i64, tpu.core_type = #tpu.core_type<tc>, window_params = [{transform_indices = @transform_0, window_bounds = array<i64: 8, 512>}, {pipeline_mode = #tpu.pipeline_mode<synchronous>, transform_indices = @transform_1, window_bounds = array<i64: 512, 128>}, {pipeline_mode = #tpu.pipeline_mode<synchronous>, transform_indices = @transform_2, window_bounds = array<i64: 1, 128>}, {pipeline_mode = #tpu.pipeline_mode<synchronous>, transform_indices = @transform_3, window_bounds = array<i64: 128, 128>}, {pipeline_mode = #tpu.pipeline_mode<synchronous>, transform_indices = @transform_4, window_bounds = array<i64: 1, 128>}, {pipeline_mode = #tpu.pipeline_mode<synchronous>, transform_indices = @transform_5, window_bounds = array<i64: 128, 128>}, {pipeline_mode = #tpu.pipeline_mode<synchronous>, transform_indices = @transform_6, window_bounds = array<i64: 1, 128>}, {transform_indices = @transform_7, window_bounds = array<i64: 8, 128>}]} {
    %c0 = arith.constant 0 : index
    %c0_0 = arith.constant 0 : index
    %0 = vector.load %arg1[%c0, %c0_0] : memref<8x512xf32, #tpu.memory_space<vmem>>, vector<8x512xf32>
    %c0_1 = arith.constant 0 : index
    %c0_2 = arith.constant 0 : index
    %1 = vector.load %arg2[%c0_1, %c0_2] : memref<512x128xf32, #tpu.memory_space<vmem>>, vector<512x128xf32>
    %cst = arith.constant dense<0.000000e+00> : vector<8x128xf32>
    %2 = tpu.matmul %0, %1, %cst {dimension_numbers = #tpu.dot_dimension_numbers<[1], [0], [0], [1], [0, 0, 1, 1], [], []>} : vector<8x512xf32>, vector<512x128xf32>, vector<8x128xf32> -> vector<8x128xf32>
    %c0_3 = arith.constant 0 : index
    %c0_4 = arith.constant 0 : index
    %3 = vector.load %arg3[%c0_3, %c0_4] : memref<1x128xf32, #tpu.memory_space<vmem>>, vector<1x128xf32>
    %4 = vector.broadcast %3 : vector<1x128xf32> to vector<8x128xf32>
    %5 = arith.addf %2, %4 : vector<8x128xf32>
    %cst_5 = arith.constant 0.000000e+00 : f32
    %6 = vector.broadcast %cst_5 : f32 to vector<8x128xf32>
    %7 = arith.maximumf %5, %6 : vector<8x128xf32>
    %c0_6 = arith.constant 0 : index
    %c0_7 = arith.constant 0 : index
    %8 = vector.load %arg4[%c0_6, %c0_7] : memref<128x128xf32, #tpu.memory_space<vmem>>, vector<128x128xf32>
    %cst_8 = arith.constant dense<0.000000e+00> : vector<8x128xf32>
    %9 = tpu.matmul %7, %8, %cst_8 {dimension_numbers = #tpu.dot_dimension_numbers<[1], [0], [0], [1], [0, 0, 1, 1], [], []>} : vector<8x128xf32>, vector<128x128xf32>, vector<8x128xf32> -> vector<8x128xf32>
    %c0_9 = arith.constant 0 : index
    %c0_10 = arith.constant 0 : index
    %10 = vector.load %arg5[%c0_9, %c0_10] : memref<1x128xf32, #tpu.memory_space<vmem>>, vector<1x128xf32>
    %11 = vector.broadcast %10 : vector<1x128xf32> to vector<8x128xf32>
    %12 = arith.addf %9, %11 : vector<8x128xf32>
    %cst_11 = arith.constant 0.000000e+00 : f32
    %13 = vector.broadcast %cst_11 : f32 to vector<8x128xf32>
    %14 = arith.maximumf %12, %13 : vector<8x128xf32>
    %c0_12 = arith.constant 0 : index
    %c0_13 = arith.constant 0 : index
    %15 = vector.load %arg6[%c0_12, %c0_13] : memref<128x128xf32, #tpu.memory_space<vmem>>, vector<128x128xf32>
    %cst_14 = arith.constant dense<0.000000e+00> : vector<8x128xf32>
    %16 = tpu.matmul %14, %15, %cst_14 {dimension_numbers = #tpu.dot_dimension_numbers<[1], [0], [0], [1], [0, 0, 1, 1], [], []>} : vector<8x128xf32>, vector<128x128xf32>, vector<8x128xf32> -> vector<8x128xf32>
    %c0_15 = arith.constant 0 : index
    %c0_16 = arith.constant 0 : index
    %17 = vector.load %arg7[%c0_15, %c0_16] : memref<1x128xf32, #tpu.memory_space<vmem>>, vector<1x128xf32>
    %18 = vector.broadcast %17 : vector<1x128xf32> to vector<8x128xf32>
    %19 = arith.addf %16, %18 : vector<8x128xf32>
    %c0_17 = arith.constant 0 : index
    %c0_18 = arith.constant 0 : index
    %20 = vector.load %arg8[%c0_17, %c0_18] : memref<8x128xf32, #tpu.memory_space<vmem>>, vector<8x128xf32>
    tpu.vector_store %arg8[%c0_17, %c0_18], %19 {strides = array<i32>} : memref<8x128xf32, #tpu.memory_space<vmem>>, vector<8x128xf32>,
    return
  }
  func.func @transform_0(%arg0: i32) -> (i32, i32) {
    %c0_i32 = arith.constant 0 : i32
    %c0_i32_0 = arith.constant 0 : i32
    return %arg0, %c0_i32 : i32, i32
  }
  func.func @transform_1(%arg0: i32) -> (i32, i32) {
    %c0_i32 = arith.constant 0 : i32
    %c0_i32_0 = arith.constant 0 : i32
    %c0_i32_1 = arith.constant 0 : i32
    return %c0_i32, %c0_i32_0 : i32, i32
  }
  func.func @transform_2(%arg0: i32) -> (i32, i32) {
    %c0_i32 = arith.constant 0 : i32
    %c0_i32_0 = arith.constant 0 : i32
    %c0_i32_1 = arith.constant 0 : i32
    return %c0_i32, %c0_i32_0 : i32, i32
  }
  func.func @transform_3(%arg0: i32) -> (i32, i32) {
    %c0_i32 = arith.constant 0 : i32
    %c0_i32_0 = arith.constant 0 : i32
    %c0_i32_1 = arith.constant 0 : i32
    return %c0_i32, %c0_i32_0 : i32, i32
  }
  func.func @transform_4(%arg0: i32) -> (i32, i32) {
    %c0_i32 = arith.constant 0 : i32
    %c0_i32_0 = arith.constant 0 : i32
    %c0_i32_1 = arith.constant 0 : i32
    return %c0_i32, %c0_i32_0 : i32, i32
  }
  func.func @transform_5(%arg0: i32) -> (i32, i32) {
    %c0_i32 = arith.constant 0 : i32
    %c0_i32_0 = arith.constant 0 : i32
    %c0_i32_1 = arith.constant 0 : i32
    return %c0_i32, %c0_i32_0 : i32, i32
  }
  func.func @transform_6(%arg0: i32) -> (i32, i32) {
    %c0_i32 = arith.constant 0 : i32
    %c0_i32_0 = arith.constant 0 : i32
    %c0_i32_1 = arith.constant 0 : i32
    return %c0_i32, %c0_i32_0 : i32, i32
  }
  func.func @transform_7(%arg0: i32) -> (i32, i32) {
    %c0_i32 = arith.constant 0 : i32
    %c0_i32_0 = arith.constant 0 : i32
    return %arg0, %c0_i32 : i32, i32
  }
}

</mosaic_0001>

<llo_original>
// kernel: lenet5_rgb_forward.3
$region0: #{lenet5_rgb_forward.3}
  #allocation0 [shape = 'u32[]', space=smem, size = 0x4, offset = 0x4, fixed_abs, tag = 'smem constant byte address 0x4 - core index']
  #allocation1 [shape = 'u32[72,128]{1,0:T(1,128)}', space=vmem, size = 0x9000, scoped, tag = 'internal scratch']
  %s0 = inlined_call_operand.vmem [shape: f32[1568,128], index: 0, kind: input, shape index: {}]
  %s1 = inlined_call_operand.vmem [shape: f32[128,128], index: 1, kind: input, shape index: {}]
  %s2 = inlined_call_operand.vmem [shape: f32[1,128], index: 2, kind: input, shape index: {}]
  %s3 = inlined_call_operand.vmem [shape: f32[1568,128], index: 3, kind: output, shape index: {}]
  %s4 = sld [smem:[#allocation0]]
  $region45: #{lenet5_rgb_forward.3} parent=0
    _
  %s6 = ssub.s32 1, %s4
  %s7 = scalar_select 0, %s6, %s4
  loop: start=0, step=1, limit=6
  $region2: #{lenet5_rgb_forward.3} parent=0 // loop_pre_header
    _
  $region3: #{lenet5_rgb_forward.3} parent=0 // loop_header
    %s9 = sphi 0, %s13
    %p10 = scmp.ge.s32.totalorder %s9, 6
    %s19 = sphi 0, %s21
    %s22 = sphi 0, %s19
    %s23 = sphi 0, %s22
    %s39 = sphi 0, %s23
    %s43 = sphi 0, %s43
    %s45 = sphi 0, %s43
    %s46 = sphi 0, %s45
    %s60 = sphi 0, %s46
    %s64 = sphi 0, %s64
    %s66 = sphi 0, %s64
    %s67 = sphi 0, %s66
    %s81 = sphi 0, %s67
    %s87 = sphi 0, %s89
    %s90 = sphi 0, %s87
    %s91 = sphi 0, %s90
    %s107 = sphi 0, %s91
  $region4: #{lenet5_rgb_forward.3} parent=0 // loop_header_branch
    %12 = sbr.rel (%p10) target = $region8
  $region5: #{lenet5_rgb_forward.3} parent=0 // loop_body
    %s14 = ssub.s32 %s9, 1
    %s15 = ssub.s32 %s9, 2
    %s16 = sadd.s32 %s9, 1
    %s17 = ssub.s32 %s9, %s16
    %p18 = scmp.eq.s32.totalorder %s17, 0
    %s20 = sadd.s32 %s19, 1
    %s21 = scalar_select %p18, %s19, %s20
    %p24 = pneg %p18
    %p25 = scmp.eq.s32.totalorder %s9, 3
    %p26 = por %p24, %p25
    %p27 = scmp.ne.s32.totalorder %s19, %s22
    %p28 = scmp.eq.s32.totalorder %s9, 0
    %p29 = por %p27, %p28
    %p30 = scmp.ne.s32.totalorder %s19, %s22
    %p31 = scmp.eq.s32.totalorder %s14, 3
    %p32 = por %p30, %p31
    %p33 = scmp.ne.s32.totalorder %s22, %s23
    %p34 = scmp.eq.s32.totalorder %s14, 0
    %p35 = por %p33, %p34
    %p36 = scmp.ne.s32.totalorder %s22, %s23
    %p37 = scmp.eq.s32.totalorder %s15, 3
    %p38 = por %p36, %p37
    %p40 = scmp.ne.s32.totalorder %s23, %s39
    %p41 = scmp.eq.s32.totalorder %s15, 0
    %p42 = por %p40, %p41
    %s44 = sadd.s32 %s43, 1
    %p47 = scmp.eq.s32.totalorder %s9, 3
    %p48 = scmp.ne.s32.totalorder %s43, %s45
    %p49 = scmp.eq.s32.totalorder %s9, 0
    %p50 = por %p48, %p49
    %p51 = scmp.ne.s32.totalorder %s43, %s45
    %p52 = scmp.eq.s32.totalorder %s14, 3
    %p53 = por %p51, %p52
    %p54 = scmp.ne.s32.totalorder %s45, %s46
    %p55 = scmp.eq.s32.totalorder %s14, 0
    %p56 = por %p54, %p55
    %p57 = scmp.ne.s32.totalorder %s45, %s46
    %p58 = scmp.eq.s32.totalorder %s15, 3
    %p59 = por %p57, %p58
    %p61 = scmp.ne.s32.totalorder %s46, %s60
    %p62 = scmp.eq.s32.totalorder %s15, 0
    %p63 = por %p61, %p62
    %s65 = sadd.s32 %s64, 1
    %p68 = scmp.eq.s32.totalorder %s9, 3
    %p69 = scmp.ne.s32.totalorder %s64, %s66
    %p70 = scmp.eq.s32.totalorder %s9, 0
    %p71 = por %p69, %p70
    %p72 = scmp.ne.s32.totalorder %s64, %s66
    %p73 = scmp.eq.s32.totalorder %s14, 3
    %p74 = por %p72, %p73
    %p75 = scmp.ne.s32.totalorder %s66, %s67
    %p76 = scmp.eq.s32.totalorder %s14, 0
    %p77 = por %p75, %p76
    %p78 = scmp.ne.s32.totalorder %s66, %s67
    %p79 = scmp.eq.s32.totalorder %s15, 3
    %p80 = por %p78, %p79
    %p82 = scmp.ne.s32.totalorder %s67, %s81
    %p83 = scmp.eq.s32.totalorder %s15, 0
    %p84 = por %p82, %p83
    %s85 = ssub.s32 %s9, %s16
    %p86 = scmp.eq.s32.totalorder %s85, 0
    %s88 = sadd.s32 %s87, 1
    %s89 = scalar_select %p86, %s87, %s88
    %p92 = pneg %p86
    %p93 = scmp.eq.s32.totalorder %s9, 3
    %p94 = por %p92, %p93
    %p95 = scmp.ne.s32.totalorder %s87, %s90
    %p96 = scmp.eq.s32.totalorder %s9, 0
    %p97 = por %p95, %p96
    %p98 = scmp.ne.s32.totalorder %s87, %s90
    %p99 = scmp.eq.s32.totalorder %s14, 3
    %p100 = por %p98, %p99
    %p101 = scmp.ne.s32.totalorder %s90, %s91
    %p102 = scmp.eq.s32.totalorder %s14, 0
    %p103 = por %p101, %p102
    %p104 = scmp.ne.s32.totalorder %s90, %s91
    %p105 = scmp.eq.s32.totalorder %s15, 3
    %p106 = por %p104, %p105
    %p108 = scmp.ne.s32.totalorder %s91, %s107
    %p109 = scmp.eq.s32.totalorder %s15, 0
    %p110 = por %p108, %p109
    %p111 = scmp.le.s32.totalorder 1, %s9
    %p112 = scmp.lt.s32.totalorder %s9, 5
    %p113 = pnand %p111, %p112
    %p114 = pneg %p113
    // Predicated region
    $region9: #{lenet5_rgb_forward.3} parent=5 // pred_check
      _
    $region10: #{lenet5_rgb_forward.3} parent=5 // pred_check_branch
      %116 = sbr.rel (%p113) target = $region12
    $region11: #{lenet5_rgb_forward.3} parent=5 // pred_region
      %s117 = ssub.s32 %s9, 1
      // Predicated region
      $region13: #{lenet5_rgb_forward.3} parent=11 // pred_check
        %p118 = pneg %p56
      $region14: #{lenet5_rgb_forward.3} parent=11 // pred_check_branch
        %120 = sbr.rel (%p118) target = $region16
      $region15: #{lenet5_rgb_forward.3} parent=11 // pred_region
        _
      $region16: #{lenet5_rgb_forward.3} parent=11 // pred_fallthru
        _
      // Predicated region
      $region17: #{lenet5_rgb_forward.3} parent=11 // pred_check
        %p121 = pneg %p77
      $region18: #{lenet5_rgb_forward.3} parent=11 // pred_check_branch
        %123 = sbr.rel (%p121) target = $region20
      $region19: #{lenet5_rgb_forward.3} parent=11 // pred_region
        _
      $region20: #{lenet5_rgb_forward.3} parent=11 // pred_fallthru
        _
    $region12: #{lenet5_rgb_forward.3} parent=5 // pred_fallthru
      _
    %p124 = scmp.lt.s32.totalorder %s9, 4
    // Predicated region
    $region21: #{lenet5_rgb_forward.3} parent=5 // pred_check
      %p125 = pneg %p124
    $region22: #{lenet5_rgb_forward.3} parent=5 // pred_check_branch
      %127 = sbr.rel (%p125) target = $region24
    $region23: #{lenet5_rgb_forward.3} parent=5 // pred_region
      // Predicated region
      $region25: #{lenet5_rgb_forward.3} parent=23 // pred_check
        %p128 = pneg %p29
      $region26: #{lenet5_rgb_forward.3} parent=23 // pred_check_branch
        %130 = sbr.rel (%p128) target = $region28
      $region27: #{lenet5_rgb_forward.3} parent=23 // pred_region
        %s131 = smul.u32 49, %s9
        %p132 = scmp.lt.s32.totalorder %s131, 195
        %s133 = scalar_select %p132, %s131, 195
        %s134 = smul.addr %s133, 8
        %s135 = scalar_lea.vmem %s0, %s134
        %s136 = smul.u32 49, %s9
      $region28: #{lenet5_rgb_forward.3} parent=23 // pred_fallthru
        _
    $region24: #{lenet5_rgb_forward.3} parent=5 // pred_fallthru
      _
    %p137 = scmp.le.s32.totalorder 1, %s9
    %p138 = scmp.lt.s32.totalorder %s9, 5
    %p139 = pnand %p137, %p138
    %p140 = pneg %p139
    // Predicated region
    $region29: #{lenet5_rgb_forward.3} parent=5 // pred_check
      _
    $region30: #{lenet5_rgb_forward.3} parent=5 // pred_check_branch
      %142 = sbr.rel (%p139) target = $region32
    $region31: #{lenet5_rgb_forward.3} parent=5 // pred_region
      %s143 = ssub.s32 %s9, 1
      %s144 = smul.u32 49, %s14
      %p145 = scmp.lt.s32.totalorder %s144, 195
      %s146 = scalar_select %p145, %s144, 195
      %s147 = smul.addr %s146, 8
      %s148 = scalar_lea.vmem %s0, %s147
      %p149 = pneg %p35
      %p150 = pneg %p32
      %p151 = pneg %p56
      %p152 = pneg %p53
      %p153 = pneg %p77
      %p154 = pneg %p74
      %p155 = pneg %p103
      %p156 = pneg %p100
      %s157 = smul.u32 49, %s14
      %p158 = scmp.lt.s32.totalorder %s157, 195
      %s159 = scalar_select %p158, %s157, 195
      %s160 = smul.addr %s159, 8
      %s161 = scalar_lea.vmem %s3, %s160
      %s162 = smul.u32 49, %s14
      %p163 = scmp.lt.s32.totalorder %s162, 195
      %s164 = scalar_select %p163, %s162, 195
      %s165 = smul.addr %s164, 8
      %s166 = scalar_lea.vmem %s0, %s165
      %s167 = smul.u32 49, %s14
      %s168 = smul.u32 49, %s14
      %p169 = scmp.lt.s32.totalorder %s168, 195
      %s170 = scalar_select %p169, %s168, 195
      %s171 = smul.addr %s170, 8
      %s172 = scalar_lea.vmem %s3, %s171
      %s173 = smul.u32 49, %s14
      %v174 = vld [vmem:[%s166] sm:$0xff]
      %v175 = vld [vmem:[%s166 + $0x8] sm:$0xff]
      %v176 = vld [vmem:[%s166 + $0x10] sm:$0xff]
      %v177 = vld [vmem:[%s166 + $0x18] sm:$0xff]
      %v178 = vld [vmem:[%s166 + $0x20] sm:$0xff]
      %v179 = vld [vmem:[%s166 + $0x28] sm:$0xff]
      %v180 = vld [vmem:[%s166 + $0x30] sm:$0xff]
      %v181 = vld [vmem:[%s166 + $0x38] sm:$0xff]
      %v182 = vld [vmem:[%s166 + $0x40] sm:$0xff]
      %v183 = vld [vmem:[%s166 + $0x48] sm:$0xff]
      %v184 = vld [vmem:[%s166 + $0x50] sm:$0xff]
      %v185 = vld [vmem:[%s166 + $0x58] sm:$0xff]
      %v186 = vld [vmem:[%s166 + $0x60] sm:$0xff]
      %v187 = vld [vmem:[%s166 + $0x68] sm:$0xff]
      %v188 = vld [vmem:[%s166 + $0x70] sm:$0xff]
      %v189 = vld [vmem:[%s166 + $0x78] sm:$0xff]
      %v190 = vld [vmem:[%s166 + $0x80] sm:$0xff]
      %v191 = vld [vmem:[%s166 + $0x88] sm:$0xff]
      %v192 = vld [vmem:[%s166 + $0x90] sm:$0xff]
      %v193 = vld [vmem:[%s166 + $0x98] sm:$0xff]
      %v194 = vld [vmem:[%s166 + $0xa0] sm:$0xff]
      %v195 = vld [vmem:[%s166 + $0xa8] sm:$0xff]
      %v196 = vld [vmem:[%s166 + $0xb0] sm:$0xff]
      %v197 = vld [vmem:[%s166 + $0xb8] sm:$0xff]
      %v198 = vld [vmem:[%s166 + $0xc0] sm:$0xff]
      %v199 = vld [vmem:[%s166 + $0xc8] sm:$0xff]
      %v200 = vld [vmem:[%s166 + $0xd0] sm:$0xff]
      %v201 = vld [vmem:[%s166 + $0xd8] sm:$0xff]
      %v202 = vld [vmem:[%s166 + $0xe0] sm:$0xff]
      %v203 = vld [vmem:[%s166 + $0xe8] sm:$0xff]
      %v204 = vld [vmem:[%s166 + $0xf0] sm:$0xff]
      %v205 = vld [vmem:[%s166 + $0xf8] sm:$0xff]
      %v206 = vld [vmem:[%s166 + $0x100] sm:$0xff]
      %v207 = vld [vmem:[%s166 + $0x108] sm:$0xff]
      %v208 = vld [vmem:[%s166 + $0x110] sm:$0xff]
      %v209 = vld [vmem:[%s166 + $0x118] sm:$0xff]
      %v210 = vld [vmem:[%s166 + $0x120] sm:$0xff]
      %v211 = vld [vmem:[%s166 + $0x128] sm:$0xff]
      %v212 = vld [vmem:[%s166 + $0x130] sm:$0xff]
      %v213 = vld [vmem:[%s166 + $0x138] sm:$0xff]
      %v214 = vld [vmem:[%s166 + $0x140] sm:$0xff]
      %v215 = vld [vmem:[%s166 + $0x148] sm:$0xff]
      %v216 = vld [vmem:[%s166 + $0x150] sm:$0xff]
      %v217 = vld [vmem:[%s166 + $0x158] sm:$0xff]
      %v218 = vld [vmem:[%s166 + $0x160] sm:$0xff]
      %v219 = vld [vmem:[%s166 + $0x168] sm:$0xff]
      %v220 = vld [vmem:[%s166 + $0x170] sm:$0xff]
      %v221 = vld [vmem:[%s166 + $0x178] sm:$0xff]
      %v222 = vld [vmem:[%s166 + $0x180] sm:$0xff]
      %v223 = vld [vmem:[%s1] sm:$0xff]
      %v224 = vld [vmem:[%s1 + $0x8] sm:$0xff]
      %v225 = vld [vmem:[%s1 + $0x10] sm:$0xff]
      %v226 = vld [vmem:[%s1 + $0x18] sm:$0xff]
      %v227 = vld [vmem:[%s1 + $0x20] sm:$0xff]
      %v228 = vld [vmem:[%s1 + $0x28] sm:$0xff]
      %v229 = vld [vmem:[%s1 + $0x30] sm:$0xff]
      %v230 = vld [vmem:[%s1 + $0x38] sm:$0xff]
      %v231 = vld [vmem:[%s1 + $0x40] sm:$0xff]
      %v232 = vld [vmem:[%s1 + $0x48] sm:$0xff]
      %v233 = vld [vmem:[%s1 + $0x50] sm:$0xff]
      %v234 = vld [vmem:[%s1 + $0x58] sm:$0xff]
      %v235 = vld [vmem:[%s1 + $0x60] sm:$0xff]
      %v236 = vld [vmem:[%s1 + $0x68] sm:$0xff]
      %v237 = vld [vmem:[%s1 + $0x70] sm:$0xff]
      %v238 = vld [vmem:[%s1 + $0x78] sm:$0xff]
      %v239 = vld [vmem:[%s2] sm:$0x1]
      %v241 = vperm.slane %v239, 0
      %243 = vmatpush.msra.mxu0 %v238
      %244 = vmatpush.msra.mxu0 %v237
      %245 = vmatpush.msra.mxu0 %v236
      %246 = vmatpush.msra.mxu0 %v235
      %247 = vmatpush.msra.mxu0 %v234
      %248 = vmatpush.msra.mxu0 %v233
      %249 = vmatpush.msra.mxu0 %v232
      %250 = vmatpush.msra.mxu0 %v231
      %251 = vmatpush.msra.mxu0 %v230
      %252 = vmatpush.msra.mxu0 %v229
      %253 = vmatpush.msra.mxu0 %v228
      %254 = vmatpush.msra.mxu0 %v227
      %255 = vmatpush.msra.mxu0 %v226
      %256 = vmatpush.msra.mxu0 %v225
      %257 = vmatpush.msra.mxu0 %v224
      %258 = vmatpush.msra.mxu0 %v223
      %259 = vmatmul.f32.gmra.mxu0 %v174
      %v260 = vpop.f32.mrf.mxu0
      %v261 = vadd.f32 %v241, %v260
      %262 = vmatmul.f32.gmra.mxu0 %v175
      %v263 = vpop.f32.mrf.mxu0
      %v264 = vadd.f32 %v241, %v263
      %265 = vmatmul.f32.gmra.mxu0 %v176
      %v266 = vpop.f32.mrf.mxu0
      %v267 = vadd.f32 %v241, %v266
      %268 = vmatmul.f32.gmra.mxu0 %v177
      %v269 = vpop.f32.mrf.mxu0
      %v270 = vadd.f32 %v241, %v269
      %271 = vmatmul.f32.gmra.mxu0 %v178
      %v272 = vpop.f32.mrf.mxu0
      %v273 = vadd.f32 %v241, %v272
      %274 = vmatmul.f32.gmra.mxu0 %v179
      %v275 = vpop.f32.mrf.mxu0
      %v276 = vadd.f32 %v241, %v275
      %277 = vmatmul.f32.gmra.mxu0 %v180
      %v278 = vpop.f32.mrf.mxu0
      %v279 = vadd.f32 %v241, %v278
      %280 = vmatmul.f32.gmra.mxu0 %v181
      %v281 = vpop.f32.mrf.mxu0
      %v282 = vadd.f32 %v241, %v281
      %283 = vmatmul.f32.gmra.mxu0 %v182
      %v284 = vpop.f32.mrf.mxu0
      %v285 = vadd.f32 %v241, %v284
      %286 = vmatmul.f32.gmra.mxu0 %v183
      %v287 = vpop.f32.mrf.mxu0
      %v288 = vadd.f32 %v241, %v287
      %289 = vmatmul.f32.gmra.mxu0 %v184
      %v290 = vpop.f32.mrf.mxu0
      %v291 = vadd.f32 %v241, %v290
      %292 = vmatmul.f32.gmra.mxu0 %v185
      %v293 = vpop.f32.mrf.mxu0
      %v294 = vadd.f32 %v241, %v293
      %295 = vmatmul.f32.gmra.mxu0 %v186
      %v296 = vpop.f32.mrf.mxu0
      %v297 = vadd.f32 %v241, %v296
      %298 = vmatmul.f32.gmra.mxu0 %v187
      %v299 = vpop.f32.mrf.mxu0
      %v300 = vadd.f32 %v241, %v299
      %301 = vmatmul.f32.gmra.mxu0 %v188
      %v302 = vpop.f32.mrf.mxu0
      %v303 = vadd.f32 %v241, %v302
      %304 = vmatmul.f32.gmra.mxu0 %v189
      %v305 = vpop.f32.mrf.mxu0
      %v306 = vadd.f32 %v241, %v305
      %307 = vmatmul.f32.gmra.mxu0 %v190
      %v308 = vpop.f32.mrf.mxu0
      %v309 = vadd.f32 %v241, %v308
      %310 = vmatmul.f32.gmra.mxu0 %v191
      %v311 = vpop.f32.mrf.mxu0
      %v312 = vadd.f32 %v241, %v311
      %313 = vmatmul.f32.gmra.mxu0 %v192
      %v314 = vpop.f32.mrf.mxu0
      %v315 = vadd.f32 %v241, %v314
      %316 = vmatmul.f32.gmra.mxu0 %v193
      %v317 = vpop.f32.mrf.mxu0
      %v318 = vadd.f32 %v241, %v317
      %319 = vmatmul.f32.gmra.mxu0 %v194
      %v320 = vpop.f32.mrf.mxu0
      %v321 = vadd.f32 %v241, %v320
      %322 = vmatmul.f32.gmra.mxu0 %v195
      %v323 = vpop.f32.mrf.mxu0
      %v324 = vadd.f32 %v241, %v323
      %325 = vmatmul.f32.gmra.mxu0 %v196
      %v326 = vpop.f32.mrf.mxu0
      %v327 = vadd.f32 %v241, %v326
      %328 = vmatmul.f32.gmra.mxu0 %v197
      %v329 = vpop.f32.mrf.mxu0
      %v330 = vadd.f32 %v241, %v329
      %331 = vmatmul.f32.gmra.mxu0 %v198
      %v332 = vpop.f32.mrf.mxu0
      %v333 = vadd.f32 %v241, %v332
      %334 = vmatmul.f32.gmra.mxu0 %v199
      %v335 = vpop.f32.mrf.mxu0
      %v336 = vadd.f32 %v241, %v335
      %337 = vmatmul.f32.gmra.mxu0 %v200
      %v338 = vpop.f32.mrf.mxu0
      %v339 = vadd.f32 %v241, %v338
      %340 = vmatmul.f32.gmra.mxu0 %v201
      %v341 = vpop.f32.mrf.mxu0
      %v342 = vadd.f32 %v241, %v341
      %343 = vmatmul.f32.gmra.mxu0 %v202
      %v344 = vpop.f32.mrf.mxu0
      %v345 = vadd.f32 %v241, %v344
      %346 = vmatmul.f32.gmra.mxu0 %v203
      %v347 = vpop.f32.mrf.mxu0
      %v348 = vadd.f32 %v241, %v347
      %349 = vmatmul.f32.gmra.mxu0 %v204
      %v350 = vpop.f32.mrf.mxu0
      %v351 = vadd.f32 %v241, %v350
      %352 = vmatmul.f32.gmra.mxu0 %v205
      %v353 = vpop.f32.mrf.mxu0
      %v354 = vadd.f32 %v241, %v353
      %355 = vmatmul.f32.gmra.mxu0 %v206
      %v356 = vpop.f32.mrf.mxu0
      %v357 = vadd.f32 %v241, %v356
      %358 = vmatmul.f32.gmra.mxu0 %v207
      %v359 = vpop.f32.mrf.mxu0
      %v360 = vadd.f32 %v241, %v359
      %361 = vmatmul.f32.gmra.mxu0 %v208
      %v362 = vpop.f32.mrf.mxu0
      %v363 = vadd.f32 %v241, %v362
      %364 = vmatmul.f32.gmra.mxu0 %v209
      %v365 = vpop.f32.mrf.mxu0
      %v366 = vadd.f32 %v241, %v365
      %367 = vmatmul.f32.gmra.mxu0 %v210
      %v368 = vpop.f32.mrf.mxu0
      %v369 = vadd.f32 %v241, %v368
      %370 = vmatmul.f32.gmra.mxu0 %v211
      %v371 = vpop.f32.mrf.mxu0
      %v372 = vadd.f32 %v241, %v371
      %373 = vmatmul.f32.gmra.mxu0 %v212
      %v374 = vpop.f32.mrf.mxu0
      %v375 = vadd.f32 %v241, %v374
      %376 = vmatmul.f32.gmra.mxu0 %v213
      %v377 = vpop.f32.mrf.mxu0
      %v378 = vadd.f32 %v241, %v377
      %379 = vmatmul.f32.gmra.mxu0 %v214
      %v380 = vpop.f32.mrf.mxu0
      %v381 = vadd.f32 %v241, %v380
      %382 = vmatmul.f32.gmra.mxu0 %v215
      %v383 = vpop.f32.mrf.mxu0
      %v384 = vadd.f32 %v241, %v383
      %385 = vmatmul.f32.gmra.mxu0 %v216
      %v386 = vpop.f32.mrf.mxu0
      %v387 = vadd.f32 %v241, %v386
      %388 = vmatmul.f32.gmra.mxu0 %v217
      %v389 = vpop.f32.mrf.mxu0
      %v390 = vadd.f32 %v241, %v389
      %391 = vmatmul.f32.gmra.mxu0 %v218
      %v392 = vpop.f32.mrf.mxu0
      %v393 = vadd.f32 %v241, %v392
      %394 = vmatmul.f32.gmra.mxu0 %v219
      %v395 = vpop.f32.mrf.mxu0
      %v396 = vadd.f32 %v241, %v395
      %397 = vmatmul.f32.gmra.mxu0 %v220
      %v398 = vpop.f32.mrf.mxu0
      %v399 = vadd.f32 %v241, %v398
      %400 = vmatmul.f32.gmra.mxu0 %v221
      %v401 = vpop.f32.mrf.mxu0
      %v402 = vadd.f32 %v241, %v401
      %403 = vmatmul.f32.gmra.mxu0 %v222
      %v404 = vpop.f32.mrf.mxu0
      %v405 = vadd.f32 %v241, %v404
      %406 = vdwg.mxu0
      %v407 = vmax.f32 %v261, 0.0
      %v408 = vmax.f32 %v264, 0.0
      %v409 = vmax.f32 %v267, 0.0
      %v410 = vmax.f32 %v270, 0.0
      %v411 = vmax.f32 %v273, 0.0
      %v412 = vmax.f32 %v276, 0.0
      %v413 = vmax.f32 %v279, 0.0
      %v414 = vmax.f32 %v282, 0.0
      %v415 = vmax.f32 %v285, 0.0
      %v416 = vmax.f32 %v288, 0.0
      %v417 = vmax.f32 %v291, 0.0
      %v418 = vmax.f32 %v294, 0.0
      %v419 = vmax.f32 %v297, 0.0
      %v420 = vmax.f32 %v300, 0.0
      %v421 = vmax.f32 %v303, 0.0
      %v422 = vmax.f32 %v306, 0.0
      %v423 = vmax.f32 %v309, 0.0
      %v424 = vmax.f32 %v312, 0.0
      %v425 = vmax.f32 %v315, 0.0
      %v426 = vmax.f32 %v318, 0.0
      %v427 = vmax.f32 %v321, 0.0
      %v428 = vmax.f32 %v324, 0.0
      %v429 = vmax.f32 %v327, 0.0
      %v430 = vmax.f32 %v330, 0.0
      %v431 = vmax.f32 %v333, 0.0
      %v432 = vmax.f32 %v336, 0.0
      %v433 = vmax.f32 %v339, 0.0
      %v434 = vmax.f32 %v342, 0.0
      %v435 = vmax.f32 %v345, 0.0
      %v436 = vmax.f32 %v348, 0.0
      %v437 = vmax.f32 %v351, 0.0
      %v438 = vmax.f32 %v354, 0.0
      %v439 = vmax.f32 %v357, 0.0
      %v440 = vmax.f32 %v360, 0.0
      %v441 = vmax.f32 %v363, 0.0
      %v442 = vmax.f32 %v366, 0.0
      %v443 = vmax.f32 %v369, 0.0
      %v444 = vmax.f32 %v372, 0.0
      %v445 = vmax.f32 %v375, 0.0
      %v446 = vmax.f32 %v378, 0.0
      %v447 = vmax.f32 %v381, 0.0
      %v448 = vmax.f32 %v384, 0.0
      %v449 = vmax.f32 %v387, 0.0
      %v450 = vmax.f32 %v390, 0.0
      %v451 = vmax.f32 %v393, 0.0
      %v452 = vmax.f32 %v396, 0.0
      %v453 = vmax.f32 %v399, 0.0
      %v454 = vmax.f32 %v402, 0.0
      %v455 = vmax.f32 %v405, 0.0
      %456 = vst [vmem:[%s172] sm:$0xff] %v407
      %457 = vst [vmem:[%s172 + $0x8] sm:$0xff] %v408
      %458 = vst [vmem:[%s172 + $0x10] sm:$0xff] %v409
      %459 = vst [vmem:[%s172 + $0x18] sm:$0xff] %v410
      %460 = vst [vmem:[%s172 + $0x20] sm:$0xff] %v411
      %461 = vst [vmem:[%s172 + $0x28] sm:$0xff] %v412
      %462 = vst [vmem:[%s172 + $0x30] sm:$0xff] %v413
      %463 = vst [vmem:[%s172 + $0x38] sm:$0xff] %v414
      %464 = vst [vmem:[%s172 + $0x40] sm:$0xff] %v415
      %465 = vst [vmem:[%s172 + $0x48] sm:$0xff] %v416
      %466 = vst [vmem:[%s172 + $0x50] sm:$0xff] %v417
      %467 = vst [vmem:[%s172 + $0x58] sm:$0xff] %v418
      %468 = vst [vmem:[%s172 + $0x60] sm:$0xff] %v419
      %469 = vst [vmem:[%s172 + $0x68] sm:$0xff] %v420
      %470 = vst [vmem:[%s172 + $0x70] sm:$0xff] %v421
      %471 = vst [vmem:[%s172 + $0x78] sm:$0xff] %v422
      %472 = vst [vmem:[%s172 + $0x80] sm:$0xff] %v423
      %473 = vst [vmem:[%s172 + $0x88] sm:$0xff] %v424
      %474 = vst [vmem:[%s172 + $0x90] sm:$0xff] %v425
      %475 = vst [vmem:[%s172 + $0x98] sm:$0xff] %v426
      %476 = vst [vmem:[%s172 + $0xa0] sm:$0xff] %v427
      %477 = vst [vmem:[%s172 + $0xa8] sm:$0xff] %v428
      %478 = vst [vmem:[%s172 + $0xb0] sm:$0xff] %v429
      %479 = vst [vmem:[%s172 + $0xb8] sm:$0xff] %v430
      %480 = vst [vmem:[%s172 + $0xc0] sm:$0xff] %v431
      %481 = vst [vmem:[%s172 + $0xc8] sm:$0xff] %v432
      %482 = vst [vmem:[%s172 + $0xd0] sm:$0xff] %v433
      %483 = vst [vmem:[%s172 + $0xd8] sm:$0xff] %v434
      %484 = vst [vmem:[%s172 + $0xe0] sm:$0xff] %v435
      %485 = vst [vmem:[%s172 + $0xe8] sm:$0xff] %v436
      %486 = vst [vmem:[%s172 + $0xf0] sm:$0xff] %v437
      %487 = vst [vmem:[%s172 + $0xf8] sm:$0xff] %v438
      %488 = vst [vmem:[%s172 + $0x100] sm:$0xff] %v439
      %489 = vst [vmem:[%s172 + $0x108] sm:$0xff] %v440
      %490 = vst [vmem:[%s172 + $0x110] sm:$0xff] %v441
      %491 = vst [vmem:[%s172 + $0x118] sm:$0xff] %v442
      %492 = vst [vmem:[%s172 + $0x120] sm:$0xff] %v443
      %493 = vst [vmem:[%s172 + $0x128] sm:$0xff] %v444
      %494 = vst [vmem:[%s172 + $0x130] sm:$0xff] %v445
      %495 = vst [vmem:[%s172 + $0x138] sm:$0xff] %v446
      %496 = vst [vmem:[%s172 + $0x140] sm:$0xff] %v447
      %497 = vst [vmem:[%s172 + $0x148] sm:$0xff] %v448
      %498 = vst [vmem:[%s172 + $0x150] sm:$0xff] %v449
      %499 = vst [vmem:[%s172 + $0x158] sm:$0xff] %v450
      %500 = vst [vmem:[%s172 + $0x160] sm:$0xff] %v451
      %501 = vst [vmem:[%s172 + $0x168] sm:$0xff] %v452
      %502 = vst [vmem:[%s172 + $0x170] sm:$0xff] %v453
      %503 = vst [vmem:[%s172 + $0x178] sm:$0xff] %v454
      %504 = vst [vmem:[%s172 + $0x180] sm:$0xff] %v455
      %s505 = smul.u32 49, %s14
      %p506 = scmp.lt.s32.totalorder %s505, 195
      %s507 = scalar_select %p506, %s505, 195
      %s508 = smul.addr %s507, 8
      %s509 = scalar_lea.vmem %s3, %s508
      // Predicated region
      $region33: #{lenet5_rgb_forward.3} parent=31 // pred_check
        %p510 = pneg %p100
      $region34: #{lenet5_rgb_forward.3} parent=31 // pred_check_branch
        %512 = sbr.rel (%p510) target = $region36
      $region35: #{lenet5_rgb_forward.3} parent=31 // pred_region
        %s513 = smul.u32 49, %s14
      $region36: #{lenet5_rgb_forward.3} parent=31 // pred_fallthru
        _
    $region32: #{lenet5_rgb_forward.3} parent=5 // pred_fallthru
      _
    %p514 = scmp.le.s32.totalorder 2, %s9
    // Predicated region
    $region37: #{lenet5_rgb_forward.3} parent=5 // pred_check
      %p515 = pneg %p514
    $region38: #{lenet5_rgb_forward.3} parent=5 // pred_check_branch
      %517 = sbr.rel (%p515) target = $region40
    $region39: #{lenet5_rgb_forward.3} parent=5 // pred_region
      %s518 = ssub.s32 %s9, 2
      // Predicated region
      $region41: #{lenet5_rgb_forward.3} parent=39 // pred_check
        %p519 = pneg %p106
      $region42: #{lenet5_rgb_forward.3} parent=39 // pred_check_branch
        %521 = sbr.rel (%p519) target = $region44
      $region43: #{lenet5_rgb_forward.3} parent=39 // pred_region
        %s522 = smul.u32 49, %s15
        %p523 = scmp.lt.s32.totalorder %s522, 195
        %s524 = scalar_select %p523, %s522, 195
        %s525 = smul.addr %s524, 8
        %s526 = scalar_lea.vmem %s3, %s525
      $region44: #{lenet5_rgb_forward.3} parent=39 // pred_fallthru
        _
    $region40: #{lenet5_rgb_forward.3} parent=5 // pred_fallthru
      _
  $region6: #{lenet5_rgb_forward.3} parent=0 // loop_footer
    %s13 = sadd.s32 1, %s9
  $region7: #{lenet5_rgb_forward.3} parent=0 // loop_footer_branch
    %8 = sbr.rel target = $region3
  $region8: #{lenet5_rgb_forward.3} parent=0 // loop_exit
    _

// kernel: lenet5_rgb_forward.4
$region0: #{lenet5_rgb_forward.4}
  #allocation0 [shape = 'u32[]', space=smem, size = 0x4, offset = 0x4, fixed_abs, tag = 'smem constant byte address 0x4 - core index']
  #allocation1 [shape = 'u32[72,128]{1,0:T(1,128)}', space=vmem, size = 0x9000, scoped, tag = 'internal scratch']
  %s0 = inlined_call_operand.vmem [shape: f32[200,256], index: 0, kind: input, shape index: {}]
  %s1 = inlined_call_operand.vmem [shape: f32[256,128], index: 1, kind: input, shape index: {}]
  %s2 = inlined_call_operand.vmem [shape: f32[1,128], index: 2, kind: input, shape index: {}]
  %s3 = inlined_call_operand.vmem [shape: f32[200,128], index: 3, kind: output, shape index: {}]
  %s4 = sld [smem:[#allocation0]]
  $region22: #{lenet5_rgb_forward.4} parent=0
    _
  %s6 = ssub.s32 1, %s4
  %s7 = scalar_select 0, %s6, %s4
  // Predicated region
  $region2: #{lenet5_rgb_forward.4} parent=0 // pred_check
    _
  $region3: #{lenet5_rgb_forward.4} parent=0 // pred_check_branch
    %9 = sbr.rel (0) target = $region5
  $region4: #{lenet5_rgb_forward.4} parent=0 // pred_region
    _
  $region5: #{lenet5_rgb_forward.4} parent=0 // pred_fallthru
    _
  // Predicated region
  $region6: #{lenet5_rgb_forward.4} parent=0 // pred_check
    _
  $region7: #{lenet5_rgb_forward.4} parent=0 // pred_check_branch
    %11 = sbr.rel (0) target = $region9
  $region8: #{lenet5_rgb_forward.4} parent=0 // pred_region
    _
  $region9: #{lenet5_rgb_forward.4} parent=0 // pred_fallthru
    _
  // Predicated region
  $region10: #{lenet5_rgb_forward.4} parent=0 // pred_check
    _
  $region11: #{lenet5_rgb_forward.4} parent=0 // pred_check_branch
    %13 = sbr.rel (0) target = $region13
  $region12: #{lenet5_rgb_forward.4} parent=0 // pred_region
    _
  $region13: #{lenet5_rgb_forward.4} parent=0 // pred_fallthru
    _
  %v14 = vld [vmem:[%s0] sm:$0xff]
  %v15 = vld [vmem:[%s0 + $0x8] sm:$0xff]
  %v16 = vld [vmem:[%s0 + $0x10] sm:$0xff]
  %v17 = vld [vmem:[%s0 + $0x18] sm:$0xff]
  %v18 = vld [vmem:[%s0 + $0x20] sm:$0xff]
  %v19 = vld [vmem:[%s0 + $0x28] sm:$0xff]
  %v20 = vld [vmem:[%s0 + $0x30] sm:$0xff]
  %v21 = vld [vmem:[%s0 + $0x38] sm:$0xff]
  %v22 = vld [vmem:[%s0 + $0x40] sm:$0xff]
  %v23 = vld [vmem:[%s0 + $0x48] sm:$0xff]
  %v24 = vld [vmem:[%s0 + $0x50] sm:$0xff]
  %v25 = vld [vmem:[%s0 + $0x58] sm:$0xff]
  %v26 = vld [vmem:[%s0 + $0x60] sm:$0xff]
  %v27 = vld [vmem:[%s0 + $0x68] sm:$0xff]
  %v28 = vld [vmem:[%s0 + $0x70] sm:$0xff]
  %v29 = vld [vmem:[%s0 + $0x78] sm:$0xff]
  %v30 = vld [vmem:[%s0 + $0x80] sm:$0xff]
  %v31 = vld [vmem:[%s0 + $0x88] sm:$0xff]
  %v32 = vld [vmem:[%s0 + $0x90] sm:$0xff]
  %v33 = vld [vmem:[%s0 + $0x98] sm:$0xff]
  %v34 = vld [vmem:[%s0 + $0xa0] sm:$0xff]
  %v35 = vld [vmem:[%s0 + $0xa8] sm:$0xff]
  %v36 = vld [vmem:[%s0 + $0xb0] sm:$0xff]
  %v37 = vld [vmem:[%s0 + $0xb8] sm:$0xff]
  %v38 = vld [vmem:[%s0 + $0xc0] sm:$0xff]
  %v39 = vld [vmem:[%s0 + $0xc8] sm:$0xff]
  %v40 = vld [vmem:[%s0 + $0xd0] sm:$0xff]
  %v41 = vld [vmem:[%s0 + $0xd8] sm:$0xff]
  %v42 = vld [vmem:[%s0 + $0xe0] sm:$0xff]
  %v43 = vld [vmem:[%s0 + $0xe8] sm:$0xff]
  %v44 = vld [vmem:[%s0 + $0xf0] sm:$0xff]
  %v45 = vld [vmem:[%s0 + $0xf8] sm:$0xff]
  %v46 = vld [vmem:[%s0 + $0x100] sm:$0xff]
  %v47 = vld [vmem:[%s0 + $0x108] sm:$0xff]
  %v48 = vld [vmem:[%s0 + $0x110] sm:$0xff]
  %v49 = vld [vmem:[%s0 + $0x118] sm:$0xff]
  %v50 = vld [vmem:[%s0 + $0x120] sm:$0xff]
  %v51 = vld [vmem:[%s0 + $0x128] sm:$0xff]
  %v52 = vld [vmem:[%s0 + $0x130] sm:$0xff]
  %v53 = vld [vmem:[%s0 + $0x138] sm:$0xff]
  %v54 = vld [vmem:[%s0 + $0x140] sm:$0xff]
  %v55 = vld [vmem:[%s0 + $0x148] sm:$0xff]
  %v56 = vld [vmem:[%s0 + $0x150] sm:$0xff]
  %v57 = vld [vmem:[%s0 + $0x158] sm:$0xff]
  %v58 = vld [vmem:[%s0 + $0x160] sm:$0xff]
  %v59 = vld [vmem:[%s0 + $0x168] sm:$0xff]
  %v60 = vld [vmem:[%s0 + $0x170] sm:$0xff]
  %v61 = vld [vmem:[%s0 + $0x178] sm:$0xff]
  %v62 = vld [vmem:[%s0 + $0x180] sm:$0xff]
  %v63 = vld [vmem:[%s0 + $0x188] sm:$0xff]
  %v64 = vld [vmem:[%s1] sm:$0xff]
  %v65 = vld [vmem:[%s1 + $0x8] sm:$0xff]
  %v66 = vld [vmem:[%s1 + $0x10] sm:$0xff]
  %v67 = vld [vmem:[%s1 + $0x18] sm:$0xff]
  %v68 = vld [vmem:[%s1 + $0x20] sm:$0xff]
  %v69 = vld [vmem:[%s1 + $0x28] sm:$0xff]
  %v70 = vld [vmem:[%s1 + $0x30] sm:$0xff]
  %v71 = vld [vmem:[%s1 + $0x38] sm:$0xff]
  %v72 = vld [vmem:[%s1 + $0x40] sm:$0xff]
  %v73 = vld [vmem:[%s1 + $0x48] sm:$0xff]
  %v74 = vld [vmem:[%s1 + $0x50] sm:$0xff]
  %v75 = vld [vmem:[%s1 + $0x58] sm:$0xff]
  %v76 = vld [vmem:[%s1 + $0x60] sm:$0xff]
  %v77 = vld [vmem:[%s1 + $0x68] sm:$0xff]
  %v78 = vld [vmem:[%s1 + $0x70] sm:$0xff]
  %v79 = vld [vmem:[%s1 + $0x78] sm:$0xff]
  %v80 = vld [vmem:[%s1 + $0x80] sm:$0xff]
  %v81 = vld [vmem:[%s1 + $0x88] sm:$0xff]
  %v82 = vld [vmem:[%s1 + $0x90] sm:$0xff]
  %v83 = vld [vmem:[%s1 + $0x98] sm:$0xff]
  %v84 = vld [vmem:[%s1 + $0xa0] sm:$0xff]
  %v85 = vld [vmem:[%s1 + $0xa8] sm:$0xff]
  %v86 = vld [vmem:[%s1 + $0xb0] sm:$0xff]
  %v87 = vld [vmem:[%s1 + $0xb8] sm:$0xff]
  %v88 = vld [vmem:[%s1 + $0xc0] sm:$0xff]
  %v89 = vld [vmem:[%s1 + $0xc8] sm:$0xff]
  %v90 = vld [vmem:[%s1 + $0xd0] sm:$0xff]
  %v91 = vld [vmem:[%s1 + $0xd8] sm:$0xff]
  %v92 = vld [vmem:[%s1 + $0xe0] sm:$0xff]
  %v93 = vld [vmem:[%s1 + $0xe8] sm:$0xff]
  %v94 = vld [vmem:[%s1 + $0xf0] sm:$0xff]
  %v95 = vld [vmem:[%s1 + $0xf8] sm:$0xff]
  %v96 = vld [vmem:[%s2] sm:$0x1]
  %v98 = vperm.slane %v96, 0
  %100 = vmatpush.msra.mxu0 %v79
  %101 = vmatpush.msra.mxu0 %v78
  %102 = vmatpush.msra.mxu0 %v77
  %103 = vmatpush.msra.mxu0 %v76
  %104 = vmatpush.msra.mxu0 %v75
  %105 = vmatpush.msra.mxu0 %v74
  %106 = vmatpush.msra.mxu0 %v73
  %107 = vmatpush.msra.mxu0 %v72
  %108 = vmatpush.msra.mxu0 %v71
  %109 = vmatpush.msra.mxu0 %v70
  %110 = vmatpush.msra.mxu0 %v69
  %111 = vmatpush.msra.mxu0 %v68
  %112 = vmatpush.msra.mxu0 %v67
  %113 = vmatpush.msra.mxu0 %v66
  %114 = vmatpush.msra.mxu0 %v65
  %115 = vmatpush.msra.mxu0 %v64
  %116 = vmatmul.f32.gmra.mxu0 %v14
  %v117 = vpop.f32.mrf.mxu0
  %v118 = vadd.f32 %v98, %v117
  %119 = vmatmul.f32.gmra.mxu0 %v16
  %v120 = vpop.f32.mrf.mxu0
  %v121 = vadd.f32 %v98, %v120
  %122 = vmatmul.f32.gmra.mxu0 %v18
  %v123 = vpop.f32.mrf.mxu0
  %v124 = vadd.f32 %v98, %v123
  %125 = vmatmul.f32.gmra.mxu0 %v20
  %v126 = vpop.f32.mrf.mxu0
  %v127 = vadd.f32 %v98, %v126
  %128 = vmatmul.f32.gmra.mxu0 %v22
  %v129 = vpop.f32.mrf.mxu0
  %v130 = vadd.f32 %v98, %v129
  %131 = vmatmul.f32.gmra.mxu0 %v24
  %v132 = vpop.f32.mrf.mxu0
  %v133 = vadd.f32 %v98, %v132
  %134 = vmatmul.f32.gmra.mxu0 %v26
  %v135 = vpop.f32.mrf.mxu0
  %v136 = vadd.f32 %v98, %v135
  %137 = vmatmul.f32.gmra.mxu0 %v28
  %v138 = vpop.f32.mrf.mxu0
  %v139 = vadd.f32 %v98, %v138
  %140 = vmatmul.f32.gmra.mxu0 %v30
  %v141 = vpop.f32.mrf.mxu0
  %v142 = vadd.f32 %v98, %v141
  %143 = vmatmul.f32.gmra.mxu0 %v32
  %v144 = vpop.f32.mrf.mxu0
  %v145 = vadd.f32 %v98, %v144
  %146 = vmatmul.f32.gmra.mxu0 %v34
  %v147 = vpop.f32.mrf.mxu0
  %v148 = vadd.f32 %v98, %v147
  %149 = vmatmul.f32.gmra.mxu0 %v36
  %v150 = vpop.f32.mrf.mxu0
  %v151 = vadd.f32 %v98, %v150
  %152 = vmatmul.f32.gmra.mxu0 %v38
  %v153 = vpop.f32.mrf.mxu0
  %v154 = vadd.f32 %v98, %v153
  %155 = vmatmul.f32.gmra.mxu0 %v40
  %v156 = vpop.f32.mrf.mxu0
  %v157 = vadd.f32 %v98, %v156
  %158 = vmatmul.f32.gmra.mxu0 %v42
  %v159 = vpop.f32.mrf.mxu0
  %v160 = vadd.f32 %v98, %v159
  %161 = vmatmul.f32.gmra.mxu0 %v44
  %v162 = vpop.f32.mrf.mxu0
  %v163 = vadd.f32 %v98, %v162
  %164 = vmatmul.f32.gmra.mxu0 %v46
  %v165 = vpop.f32.mrf.mxu0
  %v166 = vadd.f32 %v98, %v165
  %167 = vmatmul.f32.gmra.mxu0 %v48
  %v168 = vpop.f32.mrf.mxu0
  %v169 = vadd.f32 %v98, %v168
  %170 = vmatmul.f32.gmra.mxu0 %v50
  %v171 = vpop.f32.mrf.mxu0
  %v172 = vadd.f32 %v98, %v171
  %173 = vmatmul.f32.gmra.mxu0 %v52
  %v174 = vpop.f32.mrf.mxu0
  %v175 = vadd.f32 %v98, %v174
  %176 = vmatmul.f32.gmra.mxu0 %v54
  %v177 = vpop.f32.mrf.mxu0
  %v178 = vadd.f32 %v98, %v177
  %179 = vmatmul.f32.gmra.mxu0 %v56
  %v180 = vpop.f32.mrf.mxu0
  %v181 = vadd.f32 %v98, %v180
  %182 = vmatmul.f32.gmra.mxu0 %v58
  %v183 = vpop.f32.mrf.mxu0
  %v184 = vadd.f32 %v98, %v183
  %185 = vmatmul.f32.gmra.mxu0 %v60
  %v186 = vpop.f32.mrf.mxu0
  %v187 = vadd.f32 %v98, %v186
  %188 = vmatmul.f32.gmra.mxu0 %v62
  %v189 = vpop.f32.mrf.mxu0
  %v190 = vadd.f32 %v98, %v189
  %191 = vdwg.mxu0
  %192 = vmatpush.msra.mxu0 %v95
  %193 = vmatpush.msra.mxu0 %v94
  %194 = vmatpush.msra.mxu0 %v93
  %195 = vmatpush.msra.mxu0 %v92
  %196 = vmatpush.msra.mxu0 %v91
  %197 = vmatpush.msra.mxu0 %v90
  %198 = vmatpush.msra.mxu0 %v89
  %199 = vmatpush.msra.mxu0 %v88
  %200 = vmatpush.msra.mxu0 %v87
  %201 = vmatpush.msra.mxu0 %v86
  %202 = vmatpush.msra.mxu0 %v85
  %203 = vmatpush.msra.mxu0 %v84
  %204 = vmatpush.msra.mxu0 %v83
  %205 = vmatpush.msra.mxu0 %v82
  %206 = vmatpush.msra.mxu0 %v81
  %207 = vmatpush.msra.mxu0 %v80
  %208 = vmatmul.f32.gmra.mxu0 %v15
  %v209 = vpop.f32.mrf.mxu0
  %v210 = vadd.f32 %v118, %v209
  %211 = vmatmul.f32.gmra.mxu0 %v17
  %v212 = vpop.f32.mrf.mxu0
  %v213 = vadd.f32 %v121, %v212
  %214 = vmatmul.f32.gmra.mxu0 %v19
  %v215 = vpop.f32.mrf.mxu0
  %v216 = vadd.f32 %v124, %v215
  %217 = vmatmul.f32.gmra.mxu0 %v21
  %v218 = vpop.f32.mrf.mxu0
  %v219 = vadd.f32 %v127, %v218
  %220 = vmatmul.f32.gmra.mxu0 %v23
  %v221 = vpop.f32.mrf.mxu0
  %v222 = vadd.f32 %v130, %v221
  %223 = vmatmul.f32.gmra.mxu0 %v25
  %v224 = vpop.f32.mrf.mxu0
  %v225 = vadd.f32 %v133, %v224
  %226 = vmatmul.f32.gmra.mxu0 %v27
  %v227 = vpop.f32.mrf.mxu0
  %v228 = vadd.f32 %v136, %v227
  %229 = vmatmul.f32.gmra.mxu0 %v29
  %v230 = vpop.f32.mrf.mxu0
  %v231 = vadd.f32 %v139, %v230
  %232 = vmatmul.f32.gmra.mxu0 %v31
  %v233 = vpop.f32.mrf.mxu0
  %v234 = vadd.f32 %v142, %v233
  %235 = vmatmul.f32.gmra.mxu0 %v33
  %v236 = vpop.f32.mrf.mxu0
  %v237 = vadd.f32 %v145, %v236
  %238 = vmatmul.f32.gmra.mxu0 %v35
  %v239 = vpop.f32.mrf.mxu0
  %v240 = vadd.f32 %v148, %v239
  %241 = vmatmul.f32.gmra.mxu0 %v37
  %v242 = vpop.f32.mrf.mxu0
  %v243 = vadd.f32 %v151, %v242
  %244 = vmatmul.f32.gmra.mxu0 %v39
  %v245 = vpop.f32.mrf.mxu0
  %v246 = vadd.f32 %v154, %v245
  %247 = vmatmul.f32.gmra.mxu0 %v41
  %v248 = vpop.f32.mrf.mxu0
  %v249 = vadd.f32 %v157, %v248
  %250 = vmatmul.f32.gmra.mxu0 %v43
  %v251 = vpop.f32.mrf.mxu0
  %v252 = vadd.f32 %v160, %v251
  %253 = vmatmul.f32.gmra.mxu0 %v45
  %v254 = vpop.f32.mrf.mxu0
  %v255 = vadd.f32 %v163, %v254
  %256 = vmatmul.f32.gmra.mxu0 %v47
  %v257 = vpop.f32.mrf.mxu0
  %v258 = vadd.f32 %v166, %v257
  %259 = vmatmul.f32.gmra.mxu0 %v49
  %v260 = vpop.f32.mrf.mxu0
  %v261 = vadd.f32 %v169, %v260
  %262 = vmatmul.f32.gmra.mxu0 %v51
  %v263 = vpop.f32.mrf.mxu0
  %v264 = vadd.f32 %v172, %v263
  %265 = vmatmul.f32.gmra.mxu0 %v53
  %v266 = vpop.f32.mrf.mxu0
  %v267 = vadd.f32 %v175, %v266
  %268 = vmatmul.f32.gmra.mxu0 %v55
  %v269 = vpop.f32.mrf.mxu0
  %v270 = vadd.f32 %v178, %v269
  %271 = vmatmul.f32.gmra.mxu0 %v57
  %v272 = vpop.f32.mrf.mxu0
  %v273 = vadd.f32 %v181, %v272
  %274 = vmatmul.f32.gmra.mxu0 %v59
  %v275 = vpop.f32.mrf.mxu0
  %v276 = vadd.f32 %v184, %v275
  %277 = vmatmul.f32.gmra.mxu0 %v61
  %v278 = vpop.f32.mrf.mxu0
  %v279 = vadd.f32 %v187, %v278
  %280 = vmatmul.f32.gmra.mxu0 %v63
  %v281 = vpop.f32.mrf.mxu0
  %v282 = vadd.f32 %v190, %v281
  %283 = vdwg.mxu0
  %v284 = vmax.f32 %v210, 0.0
  %v285 = vmax.f32 %v213, 0.0
  %v286 = vmax.f32 %v216, 0.0
  %v287 = vmax.f32 %v219, 0.0
  %v288 = vmax.f32 %v222, 0.0
  %v289 = vmax.f32 %v225, 0.0
  %v290 = vmax.f32 %v228, 0.0
  %v291 = vmax.f32 %v231, 0.0
  %v292 = vmax.f32 %v234, 0.0
  %v293 = vmax.f32 %v237, 0.0
  %v294 = vmax.f32 %v240, 0.0
  %v295 = vmax.f32 %v243, 0.0
  %v296 = vmax.f32 %v246, 0.0
  %v297 = vmax.f32 %v249, 0.0
  %v298 = vmax.f32 %v252, 0.0
  %v299 = vmax.f32 %v255, 0.0
  %v300 = vmax.f32 %v258, 0.0
  %v301 = vmax.f32 %v261, 0.0
  %v302 = vmax.f32 %v264, 0.0
  %v303 = vmax.f32 %v267, 0.0
  %v304 = vmax.f32 %v270, 0.0
  %v305 = vmax.f32 %v273, 0.0
  %v306 = vmax.f32 %v276, 0.0
  %v307 = vmax.f32 %v279, 0.0
  %v308 = vmax.f32 %v282, 0.0
  %309 = vst [vmem:[%s3] sm:$0xff] %v284
  %310 = vst [vmem:[%s3 + $0x8] sm:$0xff] %v285
  %311 = vst [vmem:[%s3 + $0x10] sm:$0xff] %v286
  %312 = vst [vmem:[%s3 + $0x18] sm:$0xff] %v287
  %313 = vst [vmem:[%s3 + $0x20] sm:$0xff] %v288
  %314 = vst [vmem:[%s3 + $0x28] sm:$0xff] %v289
  %315 = vst [vmem:[%s3 + $0x30] sm:$0xff] %v290
  %316 = vst [vmem:[%s3 + $0x38] sm:$0xff] %v291
  %317 = vst [vmem:[%s3 + $0x40] sm:$0xff] %v292
  %318 = vst [vmem:[%s3 + $0x48] sm:$0xff] %v293
  %319 = vst [vmem:[%s3 + $0x50] sm:$0xff] %v294
  %320 = vst [vmem:[%s3 + $0x58] sm:$0xff] %v295
  %321 = vst [vmem:[%s3 + $0x60] sm:$0xff] %v296
  %322 = vst [vmem:[%s3 + $0x68] sm:$0xff] %v297
  %323 = vst [vmem:[%s3 + $0x70] sm:$0xff] %v298
  %324 = vst [vmem:[%s3 + $0x78] sm:$0xff] %v299
  %325 = vst [vmem:[%s3 + $0x80] sm:$0xff] %v300
  %326 = vst [vmem:[%s3 + $0x88] sm:$0xff] %v301
  %327 = vst [vmem:[%s3 + $0x90] sm:$0xff] %v302
  %328 = vst [vmem:[%s3 + $0x98] sm:$0xff] %v303
  %329 = vst [vmem:[%s3 + $0xa0] sm:$0xff] %v304
  %330 = vst [vmem:[%s3 + $0xa8] sm:$0xff] %v305
  %331 = vst [vmem:[%s3 + $0xb0] sm:$0xff] %v306
  %332 = vst [vmem:[%s3 + $0xb8] sm:$0xff] %v307
  %333 = vst [vmem:[%s3 + $0xc0] sm:$0xff] %v308
  // Predicated region
  $region14: #{lenet5_rgb_forward.4} parent=0 // pred_check
    _
  $region15: #{lenet5_rgb_forward.4} parent=0 // pred_check_branch
    %335 = sbr.rel (0) target = $region17
  $region16: #{lenet5_rgb_forward.4} parent=0 // pred_region
    _
  $region17: #{lenet5_rgb_forward.4} parent=0 // pred_fallthru
    _
  // Predicated region
  $region18: #{lenet5_rgb_forward.4} parent=0 // pred_check
    _
  $region19: #{lenet5_rgb_forward.4} parent=0 // pred_check_branch
    %337 = sbr.rel (0) target = $region21
  $region20: #{lenet5_rgb_forward.4} parent=0 // pred_region
    _
  $region21: #{lenet5_rgb_forward.4} parent=0 // pred_fallthru
    _

// kernel: lenet5_rgb_forward.5
$region0: #{lenet5_rgb_forward.5}
  #allocation0 [shape = 'u32[]', space=smem, size = 0x4, offset = 0x4, fixed_abs, tag = 'smem constant byte address 0x4 - core index']
  #allocation1 [shape = 'u32[72,128]{1,0:T(1,128)}', space=vmem, size = 0x9000, scoped, tag = 'internal scratch']
  %s0 = inlined_call_operand.vmem [shape: f32[8,512], index: 0, kind: input, shape index: {}]
  %s1 = inlined_call_operand.vmem [shape: f32[512,128], index: 1, kind: input, shape index: {}]
  %s2 = inlined_call_operand.vmem [shape: f32[1,128], index: 2, kind: input, shape index: {}]
  %s3 = inlined_call_operand.vmem [shape: f32[128,128], index: 3, kind: input, shape index: {}]
  %s4 = inlined_call_operand.vmem [shape: f32[1,128], index: 4, kind: input, shape index: {}]
  %s5 = inlined_call_operand.vmem [shape: f32[128,128], index: 5, kind: input, shape index: {}]
  %s6 = inlined_call_operand.vmem [shape: f32[1,128], index: 6, kind: input, shape index: {}]
  %s7 = inlined_call_operand.vmem [shape: f32[8,128], index: 7, kind: output, shape index: {}]
  %s8 = sld [smem:[#allocation0]]
  $region38: #{lenet5_rgb_forward.5} parent=0
    _
  %s10 = ssub.s32 1, %s8
  %s11 = scalar_select 0, %s10, %s8
  // Predicated region
  $region2: #{lenet5_rgb_forward.5} parent=0 // pred_check
    _
  $region3: #{lenet5_rgb_forward.5} parent=0 // pred_check_branch
    %13 = sbr.rel (0) target = $region5
  $region4: #{lenet5_rgb_forward.5} parent=0 // pred_region
    _
  $region5: #{lenet5_rgb_forward.5} parent=0 // pred_fallthru
    _
  // Predicated region
  $region6: #{lenet5_rgb_forward.5} parent=0 // pred_check
    _
  $region7: #{lenet5_rgb_forward.5} parent=0 // pred_check_branch
    %15 = sbr.rel (0) target = $region9
  $region8: #{lenet5_rgb_forward.5} parent=0 // pred_region
    _
  $region9: #{lenet5_rgb_forward.5} parent=0 // pred_fallthru
    _
  // Predicated region
  $region10: #{lenet5_rgb_forward.5} parent=0 // pred_check
    _
  $region11: #{lenet5_rgb_forward.5} parent=0 // pred_check_branch
    %17 = sbr.rel (0) target = $region13
  $region12: #{lenet5_rgb_forward.5} parent=0 // pred_region
    _
  $region13: #{lenet5_rgb_forward.5} parent=0 // pred_fallthru
    _
  // Predicated region
  $region14: #{lenet5_rgb_forward.5} parent=0 // pred_check
    _
  $region15: #{lenet5_rgb_forward.5} parent=0 // pred_check_branch
    %19 = sbr.rel (0) target = $region17
  $region16: #{lenet5_rgb_forward.5} parent=0 // pred_region
    _
  $region17: #{lenet5_rgb_forward.5} parent=0 // pred_fallthru
    _
  // Predicated region
  $region18: #{lenet5_rgb_forward.5} parent=0 // pred_check
    _
  $region19: #{lenet5_rgb_forward.5} parent=0 // pred_check_branch
    %21 = sbr.rel (0) target = $region21
  $region20: #{lenet5_rgb_forward.5} parent=0 // pred_region
    _
  $region21: #{lenet5_rgb_forward.5} parent=0 // pred_fallthru
    _
  // Predicated region
  $region22: #{lenet5_rgb_forward.5} parent=0 // pred_check
    _
  $region23: #{lenet5_rgb_forward.5} parent=0 // pred_check_branch
    %23 = sbr.rel (0) target = $region25
  $region24: #{lenet5_rgb_forward.5} parent=0 // pred_region
    _
  $region25: #{lenet5_rgb_forward.5} parent=0 // pred_fallthru
    _
  // Predicated region
  $region26: #{lenet5_rgb_forward.5} parent=0 // pred_check
    _
  $region27: #{lenet5_rgb_forward.5} parent=0 // pred_check_branch
    %25 = sbr.rel (0) target = $region29
  $region28: #{lenet5_rgb_forward.5} parent=0 // pred_region
    _
  $region29: #{lenet5_rgb_forward.5} parent=0 // pred_fallthru
    _
  %v26 = vld [vmem:[%s0] sm:$0xff]
  %v27 = vld [vmem:[%s0 + $0x8] sm:$0xff]
  %v28 = vld [vmem:[%s0 + $0x10] sm:$0xff]
  %v29 = vld [vmem:[%s0 + $0x18] sm:$0xff]
  %v30 = vld [vmem:[%s1] sm:$0xff]
  %v31 = vld [vmem:[%s1 + $0x8] sm:$0xff]
  %v32 = vld [vmem:[%s1 + $0x10] sm:$0xff]
  %v33 = vld [vmem:[%s1 + $0x18] sm:$0xff]
  %v34 = vld [vmem:[%s1 + $0x20] sm:$0xff]
  %v35 = vld [vmem:[%s1 + $0x28] sm:$0xff]
  %v36 = vld [vmem:[%s1 + $0x30] sm:$0xff]
  %v37 = vld [vmem:[%s1 + $0x38] sm:$0xff]
  %v38 = vld [vmem:[%s1 + $0x40] sm:$0xff]
  %v39 = vld [vmem:[%s1 + $0x48] sm:$0xff]
  %v40 = vld [vmem:[%s1 + $0x50] sm:$0xff]
  %v41 = vld [vmem:[%s1 + $0x58] sm:$0xff]
  %v42 = vld [vmem:[%s1 + $0x60] sm:$0xff]
  %v43 = vld [vmem:[%s1 + $0x68] sm:$0xff]
  %v44 = vld [vmem:[%s1 + $0x70] sm:$0xff]
  %v45 = vld [vmem:[%s1 + $0x78] sm:$0xff]
  %v46 = vld [vmem:[%s1 + $0x80] sm:$0xff]
  %v47 = vld [vmem:[%s1 + $0x88] sm:$0xff]
  %v48 = vld [vmem:[%s1 + $0x90] sm:$0xff]
  %v49 = vld [vmem:[%s1 + $0x98] sm:$0xff]
  %v50 = vld [vmem:[%s1 + $0xa0] sm:$0xff]
  %v51 = vld [vmem:[%s1 + $0xa8] sm:$0xff]
  %v52 = vld [vmem:[%s1 + $0xb0] sm:$0xff]
  %v53 = vld [vmem:[%s1 + $0xb8] sm:$0xff]
  %v54 = vld [vmem:[%s1 + $0xc0] sm:$0xff]
  %v55 = vld [vmem:[%s1 + $0xc8] sm:$0xff]
  %v56 = vld [vmem:[%s1 + $0xd0] sm:$0xff]
  %v57 = vld [vmem:[%s1 + $0xd8] sm:$0xff]
  %v58 = vld [vmem:[%s1 + $0xe0] sm:$0xff]
  %v59 = vld [vmem:[%s1 + $0xe8] sm:$0xff]
  %v60 = vld [vmem:[%s1 + $0xf0] sm:$0xff]
  %v61 = vld [vmem:[%s1 + $0xf8] sm:$0xff]
  %v62 = vld [vmem:[%s1 + $0x100] sm:$0xff]
  %v63 = vld [vmem:[%s1 + $0x108] sm:$0xff]
  %v64 = vld [vmem:[%s1 + $0x110] sm:$0xff]
  %v65 = vld [vmem:[%s1 + $0x118] sm:$0xff]
  %v66 = vld [vmem:[%s1 + $0x120] sm:$0xff]
  %v67 = vld [vmem:[%s1 + $0x128] sm:$0xff]
  %v68 = vld [vmem:[%s1 + $0x130] sm:$0xff]
  %v69 = vld [vmem:[%s1 + $0x138] sm:$0xff]
  %v70 = vld [vmem:[%s1 + $0x140] sm:$0xff]
  %v71 = vld [vmem:[%s1 + $0x148] sm:$0xff]
  %v72 = vld [vmem:[%s1 + $0x150] sm:$0xff]
  %v73 = vld [vmem:[%s1 + $0x158] sm:$0xff]
  %v74 = vld [vmem:[%s1 + $0x160] sm:$0xff]
  %v75 = vld [vmem:[%s1 + $0x168] sm:$0xff]
  %v76 = vld [vmem:[%s1 + $0x170] sm:$0xff]
  %v77 = vld [vmem:[%s1 + $0x178] sm:$0xff]
  %v78 = vld [vmem:[%s1 + $0x180] sm:$0xff]
  %v79 = vld [vmem:[%s1 + $0x188] sm:$0xff]
  %v80 = vld [vmem:[%s1 + $0x190] sm:$0xff]
  %v81 = vld [vmem:[%s1 + $0x198] sm:$0xff]
  %v82 = vld [vmem:[%s1 + $0x1a0] sm:$0xff]
  %v83 = vld [vmem:[%s1 + $0x1a8] sm:$0xff]
  %v84 = vld [vmem:[%s1 + $0x1b0] sm:$0xff]
  %v85 = vld [vmem:[%s1 + $0x1b8] sm:$0xff]
  %v86 = vld [vmem:[%s1 + $0x1c0] sm:$0xff]
  %v87 = vld [vmem:[%s1 + $0x1c8] sm:$0xff]
  %v88 = vld [vmem:[%s1 + $0x1d0] sm:$0xff]
  %v89 = vld [vmem:[%s1 + $0x1d8] sm:$0xff]
  %v90 = vld [vmem:[%s1 + $0x1e0] sm:$0xff]
  %v91 = vld [vmem:[%s1 + $0x1e8] sm:$0xff]
  %v92 = vld [vmem:[%s1 + $0x1f0] sm:$0xff]
  %v93 = vld [vmem:[%s1 + $0x1f8] sm:$0xff]
  %v94 = vld [vmem:[%s2] sm:$0x1]
  %v96 = vperm.slane %v94, 0
  %98 = vmatpush.msra.mxu0 %v45
  %99 = vmatpush.msra.mxu0 %v44
  %100 = vmatpush.msra.mxu0 %v43
  %101 = vmatpush.msra.mxu0 %v42
  %102 = vmatpush.msra.mxu0 %v41
  %103 = vmatpush.msra.mxu0 %v40
  %104 = vmatpush.msra.mxu0 %v39
  %105 = vmatpush.msra.mxu0 %v38
  %106 = vmatpush.msra.mxu0 %v37
  %107 = vmatpush.msra.mxu0 %v36
  %108 = vmatpush.msra.mxu0 %v35
  %109 = vmatpush.msra.mxu0 %v34
  %110 = vmatpush.msra.mxu0 %v33
  %111 = vmatpush.msra.mxu0 %v32
  %112 = vmatpush.msra.mxu0 %v31
  %113 = vmatpush.msra.mxu0 %v30
  %114 = vmatmul.f32.gmra.mxu0 %v26
  %v115 = vpop.f32.mrf.mxu0
  %v116 = vadd.f32 %v96, %v115
  %117 = vdwg.mxu0
  %118 = vmatpush.msra.mxu0 %v61
  %119 = vmatpush.msra.mxu0 %v60
  %120 = vmatpush.msra.mxu0 %v59
  %121 = vmatpush.msra.mxu0 %v58
  %122 = vmatpush.msra.mxu0 %v57
  %123 = vmatpush.msra.mxu0 %v56
  %124 = vmatpush.msra.mxu0 %v55
  %125 = vmatpush.msra.mxu0 %v54
  %126 = vmatpush.msra.mxu0 %v53
  %127 = vmatpush.msra.mxu0 %v52
  %128 = vmatpush.msra.mxu0 %v51
  %129 = vmatpush.msra.mxu0 %v50
  %130 = vmatpush.msra.mxu0 %v49
  %131 = vmatpush.msra.mxu0 %v48
  %132 = vmatpush.msra.mxu0 %v47
  %133 = vmatpush.msra.mxu0 %v46
  %134 = vmatmul.f32.gmra.mxu0 %v27
  %v135 = vpop.f32.mrf.mxu0
  %v136 = vadd.f32 %v116, %v135
  %137 = vdwg.mxu0
  %138 = vmatpush.msra.mxu0 %v77
  %139 = vmatpush.msra.mxu0 %v76
  %140 = vmatpush.msra.mxu0 %v75
  %141 = vmatpush.msra.mxu0 %v74
  %142 = vmatpush.msra.mxu0 %v73
  %143 = vmatpush.msra.mxu0 %v72
  %144 = vmatpush.msra.mxu0 %v71
  %145 = vmatpush.msra.mxu0 %v70
  %146 = vmatpush.msra.mxu0 %v69
  %147 = vmatpush.msra.mxu0 %v68
  %148 = vmatpush.msra.mxu0 %v67
  %149 = vmatpush.msra.mxu0 %v66
  %150 = vmatpush.msra.mxu0 %v65
  %151 = vmatpush.msra.mxu0 %v64
  %152 = vmatpush.msra.mxu0 %v63
  %153 = vmatpush.msra.mxu0 %v62
  %154 = vmatmul.f32.gmra.mxu0 %v28
  %v155 = vpop.f32.mrf.mxu0
  %v156 = vadd.f32 %v136, %v155
  %157 = vdwg.mxu0
  %158 = vmatpush.msra.mxu0 %v93
  %159 = vmatpush.msra.mxu0 %v92
  %160 = vmatpush.msra.mxu0 %v91
  %161 = vmatpush.msra.mxu0 %v90
  %162 = vmatpush.msra.mxu0 %v89
  %163 = vmatpush.msra.mxu0 %v88
  %164 = vmatpush.msra.mxu0 %v87
  %165 = vmatpush.msra.mxu0 %v86
  %166 = vmatpush.msra.mxu0 %v85
  %167 = vmatpush.msra.mxu0 %v84
  %168 = vmatpush.msra.mxu0 %v83
  %169 = vmatpush.msra.mxu0 %v82
  %170 = vmatpush.msra.mxu0 %v81
  %171 = vmatpush.msra.mxu0 %v80
  %172 = vmatpush.msra.mxu0 %v79
  %173 = vmatpush.msra.mxu0 %v78
  %174 = vmatmul.f32.gmra.mxu0 %v29
  %v175 = vpop.f32.mrf.mxu0
  %v176 = vadd.f32 %v156, %v175
  %177 = vdwg.mxu0
  %v178 = vmax.f32 %v176, 0.0
  %v179 = vld [vmem:[%s3] sm:$0xff]
  %v180 = vld [vmem:[%s3 + $0x8] sm:$0xff]
  %v181 = vld [vmem:[%s3 + $0x10] sm:$0xff]
  %v182 = vld [vmem:[%s3 + $0x18] sm:$0xff]
  %v183 = vld [vmem:[%s3 + $0x20] sm:$0xff]
  %v184 = vld [vmem:[%s3 + $0x28] sm:$0xff]
  %v185 = vld [vmem:[%s3 + $0x30] sm:$0xff]
  %v186 = vld [vmem:[%s3 + $0x38] sm:$0xff]
  %v187 = vld [vmem:[%s3 + $0x40] sm:$0xff]
  %v188 = vld [vmem:[%s3 + $0x48] sm:$0xff]
  %v189 = vld [vmem:[%s3 + $0x50] sm:$0xff]
  %v190 = vld [vmem:[%s3 + $0x58] sm:$0xff]
  %v191 = vld [vmem:[%s3 + $0x60] sm:$0xff]
  %v192 = vld [vmem:[%s3 + $0x68] sm:$0xff]
  %v193 = vld [vmem:[%s3 + $0x70] sm:$0xff]
  %v194 = vld [vmem:[%s3 + $0x78] sm:$0xff]
  %v195 = vld [vmem:[%s4] sm:$0x1]
  %v197 = vperm.slane %v195, 0
  %199 = vmatpush.msra.mxu0 %v194
  %200 = vmatpush.msra.mxu0 %v193
  %201 = vmatpush.msra.mxu0 %v192
  %202 = vmatpush.msra.mxu0 %v191
  %203 = vmatpush.msra.mxu0 %v190
  %204 = vmatpush.msra.mxu0 %v189
  %205 = vmatpush.msra.mxu0 %v188
  %206 = vmatpush.msra.mxu0 %v187
  %207 = vmatpush.msra.mxu0 %v186
  %208 = vmatpush.msra.mxu0 %v185
  %209 = vmatpush.msra.mxu0 %v184
  %210 = vmatpush.msra.mxu0 %v183
  %211 = vmatpush.msra.mxu0 %v182
  %212 = vmatpush.msra.mxu0 %v181
  %213 = vmatpush.msra.mxu0 %v180
  %214 = vmatpush.msra.mxu0 %v179
  %215 = vmatmul.f32.gmra.mxu0 %v178
  %v216 = vpop.f32.mrf.mxu0
  %v217 = vadd.f32 %v197, %v216
  %218 = vdwg.mxu0
  %v219 = vmax.f32 %v217, 0.0
  %v220 = vld [vmem:[%s5] sm:$0xff]
  %v221 = vld [vmem:[%s5 + $0x8] sm:$0xff]
  %v222 = vld [vmem:[%s5 + $0x10] sm:$0xff]
  %v223 = vld [vmem:[%s5 + $0x18] sm:$0xff]
  %v224 = vld [vmem:[%s5 + $0x20] sm:$0xff]
  %v225 = vld [vmem:[%s5 + $0x28] sm:$0xff]
  %v226 = vld [vmem:[%s5 + $0x30] sm:$0xff]
  %v227 = vld [vmem:[%s5 + $0x38] sm:$0xff]
  %v228 = vld [vmem:[%s5 + $0x40] sm:$0xff]
  %v229 = vld [vmem:[%s5 + $0x48] sm:$0xff]
  %v230 = vld [vmem:[%s5 + $0x50] sm:$0xff]
  %v231 = vld [vmem:[%s5 + $0x58] sm:$0xff]
  %v232 = vld [vmem:[%s5 + $0x60] sm:$0xff]
  %v233 = vld [vmem:[%s5 + $0x68] sm:$0xff]
  %v234 = vld [vmem:[%s5 + $0x70] sm:$0xff]
  %v235 = vld [vmem:[%s5 + $0x78] sm:$0xff]
  %v236 = vld [vmem:[%s6] sm:$0x1]
  %v238 = vperm.slane %v236, 0
  %240 = vmatpush.msra.mxu0 %v235
  %241 = vmatpush.msra.mxu0 %v234
  %242 = vmatpush.msra.mxu0 %v233
  %243 = vmatpush.msra.mxu0 %v232
  %244 = vmatpush.msra.mxu0 %v231
  %245 = vmatpush.msra.mxu0 %v230
  %246 = vmatpush.msra.mxu0 %v229
  %247 = vmatpush.msra.mxu0 %v228
  %248 = vmatpush.msra.mxu0 %v227
  %249 = vmatpush.msra.mxu0 %v226
  %250 = vmatpush.msra.mxu0 %v225
  %251 = vmatpush.msra.mxu0 %v224
  %252 = vmatpush.msra.mxu0 %v223
  %253 = vmatpush.msra.mxu0 %v222
  %254 = vmatpush.msra.mxu0 %v221
  %255 = vmatpush.msra.mxu0 %v220
  %256 = vmatmul.f32.gmra.mxu0 %v219
  %v257 = vpop.f32.mrf.mxu0
  %v258 = vadd.f32 %v238, %v257
  %259 = vdwg.mxu0
  %260 = vst [vmem:[%s7] sm:$0xff] %v258
  // Predicated region
  $region30: #{lenet5_rgb_forward.5} parent=0 // pred_check
    _
  $region31: #{lenet5_rgb_forward.5} parent=0 // pred_check_branch
    %262 = sbr.rel (0) target = $region33
  $region32: #{lenet5_rgb_forward.5} parent=0 // pred_region
    _
  $region33: #{lenet5_rgb_forward.5} parent=0 // pred_fallthru
    _
  // Predicated region
  $region34: #{lenet5_rgb_forward.5} parent=0 // pred_check
    _
  $region35: #{lenet5_rgb_forward.5} parent=0 // pred_check_branch
    %264 = sbr.rel (0) target = $region37
  $region36: #{lenet5_rgb_forward.5} parent=0 // pred_region
    _
  $region37: #{lenet5_rgb_forward.5} parent=0 // pred_fallthru
    _

</llo_original>
